<compile_context>
chip_gen: v5e
topology: v5e:2x2
jax: 0.10.0
libtpu: 0.0.40
codegen_flags: <defaults>
</compile_context>

<pallas_src>
import jax
import jax.numpy as jnp
from jax.experimental import pallas as pl
from jax.experimental.pallas import tpu as pltpu

D_MODEL = 128          # MTGRU hidden size (module default)
ENC_DIM = 768          # ELECTRA hidden size (hard-coded in GRUCell(768, d_model))
NUM_CLASSES = 21       # classifier output
CLS_PAD = 128          # lane-padded classifier width (sliced back to 21)
DROPOUT_P = 0.5


def _pad_batch(b):
    if b <= 128:
        return ((b + 7) // 8) * 8
    return ((b + 127) // 128) * 128


# ------------------ hoisted batched input projection --------------------------
def proj_kernel(x_ref, w_ref, b_ref, o_ref):
    o_ref[...] = (jnp.dot(x_ref[...], w_ref[...],
                          preferred_element_type=jnp.float32)
                  + b_ref[...]).astype(o_ref.dtype)


def input_projection(x, w, b):
    """x: (rows, 768) f32, w: (768, 6D)=[W_ih1 | W_ih2_x], b: (1, 6D) -> bf16 gates."""
    rows, E = x.shape
    N = w.shape[1]
    TM = rows if rows <= 512 else 512
    rows_pad = ((rows + TM - 1) // TM) * TM
    if rows_pad != rows:
        x = jnp.zeros((rows_pad, E), x.dtype).at[:rows].set(x)
    out = pl.pallas_call(
        proj_kernel,
        out_shape=jax.ShapeDtypeStruct((rows_pad, N), jnp.bfloat16),
        grid_spec=pltpu.PrefetchScalarGridSpec(
            num_scalar_prefetch=0,
            grid=(rows_pad // TM,),
            in_specs=[pl.BlockSpec((TM, E), lambda i: (i, 0)),
                      pl.BlockSpec((E, N), lambda i: (0, 0)),
                      pl.BlockSpec((1, N), lambda i: (0, 0))],
            out_specs=pl.BlockSpec((TM, N), lambda i: (i, 0)),
        ),
        compiler_params=pltpu.CompilerParams(dimension_semantics=("parallel",)),
    )(x, w, b)
    return out[:rows]


# -------- streamed MTGRU recurrence + gather + dropout + classifier kernel -----
def recurrence_kernel(inv_tau_ref, g_ref,
                      whh_ref, bhh_ref, wih2h_ref,
                      tok_ref, mask_ref, wcls_ref, bcls_ref,
                      out_ref, h12_ref, gath_ref):
    D = D_MODEL
    t = pl.program_id(1)
    T = pl.num_programs(1)
    inv_t1 = inv_tau_ref[0]
    inv_t2 = inv_tau_ref[1]

    @pl.when(t == 0)
    def _():
        h12_ref[...] = jnp.zeros_like(h12_ref)
        gath_ref[...] = jnp.zeros_like(gath_ref)

    g = g_ref[...].astype(jnp.float32)          # (TB, 6D): [gi1 | gi2_x] precomputed
    gi1 = g[:, :3 * D]
    gi2x = g[:, 3 * D:]

    h12 = h12_ref[...]                          # (TB, 2D) = [h1 | h2]
    h1 = h12[:, :D]
    h2 = h12[:, D:]

    # One fused K=2D dot over block-diagonal hidden weights:
    #   [h1 | h2] @ [[W_hh1, 0], [0, W_hh2]] + [b_hh1 | b_hh2] = [gh1 | gh2]
    # Depends only on the previous step's state -> issued at the top of the step.
    gh12 = jnp.dot(h12, whh_ref[...], preferred_element_type=jnp.float32) + bhh_ref[...]
    gh1 = gh12[:, :3 * D]
    gh2 = gh12[:, 3 * D:]

    # --- GRUCell 1 (PyTorch gate order r, z, n); r/z share one sigmoid push ---
    rz1 = jax.nn.sigmoid(gi1[:, :2 * D] + gh1[:, :2 * D])
    r1 = rz1[:, :D]
    z1 = rz1[:, D:]
    n1 = jnp.tanh(gi1[:, 2 * D:] + r1 * gh1[:, 2 * D:])
    h1c = (1.0 - z1) * n1 + z1 * h1
    h1n = (1.0 - inv_t1) * h1 + inv_t1 * h1c

    # --- GRUCell 2, input = concat(x, h1_new) folded into split matmuls ---
    gi2 = gi2x + jnp.dot(h1n, wih2h_ref[...], preferred_element_type=jnp.float32)
    rz2 = jax.nn.sigmoid(gi2[:, :2 * D] + gh2[:, :2 * D])
    r2 = rz2[:, :D]
    z2 = rz2[:, D:]
    n2 = jnp.tanh(gi2[:, 2 * D:] + r2 * gh2[:, 2 * D:])
    h2c = (1.0 - z2) * n2 + z2 * h2
    h2n = (1.0 - inv_t2) * h2 + inv_t2 * h2c

    h12_ref[:, :D] = h1n
    h12_ref[:, D:] = h2n

    # gather the row where (token_num - 1) == t ; no concat temporary
    sel = tok_ref[...] == t                     # (TB, 1)
    gath_ref[:, :D] = jnp.where(sel, h1n, gath_ref[:, :D])
    gath_ref[:, D:] = jnp.where(sel, h2n, gath_ref[:, D:])

    # dropout (training-mode F.dropout; mask precomputed outside) + classifier
    @pl.when(t == T - 1)
    def _():
        xg = gath_ref[...] * mask_ref[...]
        out_ref[...] = (jnp.dot(xg, wcls_ref[...], preferred_element_type=jnp.float32)
                        + bcls_ref[...])


def mtgru_classify(prep, g_tm, tok, mask):
    """g_tm: (T, B_pad, 6D) bf16 gate slab -> (B_pad, CLS_PAD) f32 logits."""
    T, B_pad, _ = g_tm.shape
    D = D_MODEL
    TB = B_pad if B_pad <= 128 else 128
    Bt = B_pad // TB

    def const(shape):
        return pl.BlockSpec(shape, lambda b, t: (0,) * len(shape))

    return pl.pallas_call(
        recurrence_kernel,
        out_shape=jax.ShapeDtypeStruct((B_pad, CLS_PAD), jnp.float32),
        grid_spec=pltpu.PrefetchScalarGridSpec(
            num_scalar_prefetch=0,
            grid=(Bt, T),
            in_specs=[
                pl.BlockSpec(memory_space=pltpu.MemorySpace.SMEM),        # inv_tau (2,)
                pl.BlockSpec((None, TB, 6 * D), lambda b, t: (t, b, 0)),  # streamed gates
                const((2 * D, 6 * D)),                                    # block-diag W_hh
                const((1, 6 * D)),                                        # [b_hh1 | b_hh2]
                const((D, 3 * D)),                                        # W_ih2 (h1 part)
                pl.BlockSpec((TB, 1), lambda b, t: (b, 0)),               # gather index
                pl.BlockSpec((TB, 2 * D), lambda b, t: (b, 0)),           # dropout mask
                const((2 * D, CLS_PAD)),                                  # classifier W (padded)
                const((1, CLS_PAD)),                                      # classifier b (padded)
            ],
            out_specs=pl.BlockSpec((TB, CLS_PAD), lambda b, t: (b, 0)),
            scratch_shapes=[pltpu.VMEM((TB, 2 * D), jnp.float32),   # [h1 | h2]
                            pltpu.VMEM((TB, 2 * D), jnp.float32)],  # gathered rows
        ),
        compiler_params=pltpu.CompilerParams(
            dimension_semantics=("parallel", "arbitrary")),
    )(prep["inv_tau"], g_tm, prep["w_hh_stack"], prep["b_hh_stack"], prep["w_ih2_h"],
      tok, mask, prep["w_cls_pad"], prep["b_cls_pad"])


# ---------------------- one-time parameter packing (hoisted) -------------------
def prepare_params(params):
    D = D_MODEL
    w_hh_stack = jnp.zeros((2 * D, 6 * D), jnp.float32)
    w_hh_stack = w_hh_stack.at[:D, :3 * D].set(params["w_hh1"])
    w_hh_stack = w_hh_stack.at[D:, 3 * D:].set(params["w_hh2"])
    return {
        "w_in": jnp.concatenate([params["w_ih1"], params["w_ih2_x"]], axis=1),   # (768, 6D)
        "b_in": jnp.concatenate([params["b_ih1"], params["b_ih2"]], axis=1),     # (1, 6D)
        "w_hh_stack": w_hh_stack,                                                # (2D, 6D)
        "b_hh_stack": jnp.concatenate([params["b_hh1"], params["b_hh2"]], axis=1),
        "w_ih2_h": params["w_ih2_h"],
        "w_cls_pad": jnp.zeros((2 * D, CLS_PAD), jnp.float32).at[:, :NUM_CLASSES].set(params["w_cls"]),
        "b_cls_pad": jnp.zeros((1, CLS_PAD), jnp.float32).at[:, :NUM_CLASSES].set(params["b_cls"]),
        "inv_tau": jnp.stack([1.0 / params["tau1"], 1.0 / params["tau2"]]).astype(jnp.float32),
        "electra_emb": params["electra_emb"],
    }


# ------------------------------- full model ------------------------------------
def mymodel_forward(input_ids, token_num_list, prep, dropout_key):
    B, T = input_ids.shape
    B_pad = _pad_batch(B)

    # TODO(synk): pretrained ELECTRA encoder has no Pallas equivalent here;
    # replaced by a deterministic embedding-table stand-in producing (T, B, 768).
    ids_pad = jnp.zeros((B_pad, T), jnp.int32).at[:B].set(input_ids)
    enc_tm = prep["electra_emb"][ids_pad.T]                       # (T, B_pad, 768) time-major

    # Hoisted batched projection: one (T*B_pad, 768) x (768, 768) matmul -> bf16 gates.
    g = input_projection(enc_tm.reshape(T * B_pad, ENC_DIM), prep["w_in"], prep["b_in"])
    g_tm = g.reshape(T, B_pad, 6 * D_MODEL)

    # token gather index (matches torch negative-index wrap), padded to B_pad
    tok = (token_num_list.astype(jnp.int32) - 1) % T
    tok = jnp.zeros((B_pad, 1), jnp.int32).at[:B, 0].set(tok)

    # TODO(synk): RNG stream differs from torch.nn.functional.dropout (training=True).
    keep = jax.random.bernoulli(dropout_key, 1.0 - DROPOUT_P, (B_pad, 2 * D_MODEL))
    mask = keep.astype(jnp.float32) * (1.0 / (1.0 - DROPOUT_P))

    logits = mtgru_classify(prep, g_tm, tok, mask)
    return logits[:B, :NUM_CLASSES]


# ------------------------- pure-JAX f32 reference -------------------------------
def reference_forward(input_ids, token_num_list, params, dropout_mask):
    B, T = input_ids.shape
    D = D_MODEL
    enc = params["electra_emb"][input_ids]                         # (B, T, 768)
    h1 = jnp.zeros((B, D), jnp.float32)
    h2 = jnp.zeros((B, D), jnp.float32)
    inv1 = 1.0 / params["tau1"]
    inv2 = 1.0 / params["tau2"]
    outs = []
    for t in range(T):
        x = enc[:, t]
        gi1 = x @ params["w_ih1"] + params["b_ih1"]
        gh1 = h1 @ params["w_hh1"] + params["b_hh1"]
        r1 = jax.nn.sigmoid(gi1[:, :D] + gh1[:, :D])
        z1 = jax.nn.sigmoid(gi1[:, D:2 * D] + gh1[:, D:2 * D])
        n1 = jnp.tanh(gi1[:, 2 * D:] + r1 * gh1[:, 2 * D:])
        h1_ = (1 - z1) * n1 + z1 * h1
        h1 = (1 - inv1) * h1 + inv1 * h1_
        gi2 = x @ params["w_ih2_x"] + h1 @ params["w_ih2_h"] + params["b_ih2"]
        gh2 = h2 @ params["w_hh2"] + params["b_hh2"]
        r2 = jax.nn.sigmoid(gi2[:, :D] + gh2[:, :D])
        z2 = jax.nn.sigmoid(gi2[:, D:2 * D] + gh2[:, D:2 * D])
        n2 = jnp.tanh(gi2[:, 2 * D:] + r2 * gh2[:, 2 * D:])
        h2_ = (1 - z2) * n2 + z2 * h2
        h2 = (1 - inv2) * h2 + inv2 * h2_
        outs.append(jnp.concatenate([h1, h2], axis=1))
    seq = jnp.stack(outs, axis=1)                                  # (B, T, 2D)
    tok = (token_num_list.astype(jnp.int32) - 1) % T
    gathered = seq[jnp.arange(B), tok]                             # (B, 2D)
    return (gathered * dropout_mask) @ params["w_cls"] + params["b_cls"]


# --------------------------------- main -----------------------------------------
if __name__ == "__main__":
    import numpy as np

    B, T, VOCAB = 2, 8, 1000

    key = jax.random.PRNGKey(0)
    ks = jax.random.split(key, 16)

    def unif(k, shape, scale):
        return jax.random.uniform(k, shape, jnp.float32, -scale, scale)

    s = float(1.0 / (D_MODEL ** 0.5))   # PyTorch GRUCell init scale
    params = {
        "tau1": jnp.array(1.0, jnp.float32),
        "tau2": jnp.array(1.2, jnp.float32),
        # GRUCell 1 (input 768) — stored transposed: (in, 3*hidden)
        "w_ih1": unif(ks[0], (ENC_DIM, 3 * D_MODEL), s),
        "w_hh1": unif(ks[1], (D_MODEL, 3 * D_MODEL), s),
        "b_ih1": unif(ks[2], (1, 3 * D_MODEL), s),
        "b_hh1": unif(ks[3], (1, 3 * D_MODEL), s),
        # GRUCell 2 (input 768 + d_model) — W_ih split into x part and h1 part
        "w_ih2_x": unif(ks[4], (ENC_DIM, 3 * D_MODEL), s),
        "w_ih2_h": unif(ks[5], (D_MODEL, 3 * D_MODEL), s),
        "w_hh2": unif(ks[6], (D_MODEL, 3 * D_MODEL), s),
        "b_ih2": unif(ks[7], (1, 3 * D_MODEL), s),
        "b_hh2": unif(ks[8], (1, 3 * D_MODEL), s),
        # classifier: Linear(2*d_model, 21)
        "w_cls": unif(ks[9], (2 * D_MODEL, NUM_CLASSES), float(1.0 / (2 * D_MODEL) ** 0.5)),
        "b_cls": unif(ks[10], (1, NUM_CLASSES), float(1.0 / (2 * D_MODEL) ** 0.5)),
        # deterministic stand-in for the ELECTRA encoder
        "electra_emb": jax.random.normal(ks[11], (VOCAB, ENC_DIM), jnp.float32) * 0.02,
    }

    input_ids = jax.random.randint(ks[12], (B, T), 1, VOCAB, dtype=jnp.int32)
    token_num_list = jnp.array([T, T // 2], dtype=jnp.int32)

    prep = prepare_params(params)
    out = mymodel_forward(input_ids, token_num_list, prep, ks[13])
    out = jax.block_until_ready(out)
    assert out.shape == (B, NUM_CLASSES)

    # reproduce the exact dropout mask the kernel used (same key / padded shape)
    B_pad = _pad_batch(B)
    keep = jax.random.bernoulli(ks[13], 1.0 - DROPOUT_P, (B_pad, 2 * D_MODEL))
    mask_ref = keep.astype(jnp.float32)[:B] * (1.0 / (1.0 - DROPOUT_P))
    ref = reference_forward(input_ids, token_num_list, params, mask_ref)
    np.testing.assert_allclose(np.asarray(out), np.asarray(ref), rtol=5e-2, atol=5e-2)

    print("KERNEL_OK")
</pallas_src>

<mosaic_0001>
module attributes {stable_mosaic.version = 11 : i64} {
  func.func @proj_kernel(%arg0: i32, %arg1: memref<64x768xf32, #tpu.memory_space<vmem>>, %arg2: memref<768x768xf32, #tpu.memory_space<vmem>>, %arg3: memref<1x768xf32, #tpu.memory_space<vmem>>, %arg4: memref<64x768xbf16, #tpu.memory_space<vmem>>) attributes {dimension_semantics = [#tpu.dimension_semantics<parallel>], iteration_bounds = array<i64: 1>, scalar_prefetch = 0 : i64, scratch_operands = 0 : i64, tpu.core_type = #tpu.core_type<tc>, window_params = [{transform_indices = @transform_0, window_bounds = array<i64: 64, 768>}, {pipeline_mode = #tpu.pipeline_mode<synchronous>, transform_indices = @transform_1, window_bounds = array<i64: 768, 768>}, {pipeline_mode = #tpu.pipeline_mode<synchronous>, transform_indices = @transform_2, window_bounds = array<i64: 1, 768>}, {transform_indices = @transform_3, window_bounds = array<i64: 64, 768>}]} {
    %c0 = arith.constant 0 : index
    %c0_0 = arith.constant 0 : index
    %0 = vector.load %arg1[%c0, %c0_0] : memref<64x768xf32, #tpu.memory_space<vmem>>, vector<64x768xf32>
    %c0_1 = arith.constant 0 : index
    %c0_2 = arith.constant 0 : index
    %1 = vector.load %arg2[%c0_1, %c0_2] : memref<768x768xf32, #tpu.memory_space<vmem>>, vector<768x768xf32>
    %cst = arith.constant dense<0.000000e+00> : vector<64x768xf32>
    %2 = tpu.matmul %0, %1, %cst {dimension_numbers = #tpu.dot_dimension_numbers<[1], [0], [0], [1], [0, 0, 1, 1], [], []>} : vector<64x768xf32>, vector<768x768xf32>, vector<64x768xf32> -> vector<64x768xf32>
    %c0_3 = arith.constant 0 : index
    %c0_4 = arith.constant 0 : index
    %3 = vector.load %arg3[%c0_3, %c0_4] : memref<1x768xf32, #tpu.memory_space<vmem>>, vector<1x768xf32>
    %4 = vector.broadcast %3 : vector<1x768xf32> to vector<64x768xf32>
    %5 = arith.addf %2, %4 : vector<64x768xf32>
    %6 = arith.truncf %5 : vector<64x768xf32> to vector<64x768xbf16>
    %c0_5 = arith.constant 0 : index
    %c0_6 = arith.constant 0 : index
    %7 = vector.load %arg4[%c0_5, %c0_6] : memref<64x768xbf16, #tpu.memory_space<vmem>>, vector<64x768xbf16>
    tpu.vector_store %arg4[%c0_5, %c0_6], %6 {strides = array<i32>} : memref<64x768xbf16, #tpu.memory_space<vmem>>, vector<64x768xbf16>,
    return
  }
  func.func @transform_0(%arg0: i32) -> (i32, i32) {
    %c0_i32 = arith.constant 0 : i32
    %c0_i32_0 = arith.constant 0 : i32
    return %arg0, %c0_i32 : i32, i32
  }
  func.func @transform_1(%arg0: i32) -> (i32, i32) {
    %c0_i32 = arith.constant 0 : i32
    %c0_i32_0 = arith.constant 0 : i32
    %c0_i32_1 = arith.constant 0 : i32
    return %c0_i32, %c0_i32_0 : i32, i32
  }
  func.func @transform_2(%arg0: i32) -> (i32, i32) {
    %c0_i32 = arith.constant 0 : i32
    %c0_i32_0 = arith.constant 0 : i32
    %c0_i32_1 = arith.constant 0 : i32
    return %c0_i32, %c0_i32_0 : i32, i32
  }
  func.func @transform_3(%arg0: i32) -> (i32, i32) {
    %c0_i32 = arith.constant 0 : i32
    %c0_i32_0 = arith.constant 0 : i32
    return %arg0, %c0_i32 : i32, i32
  }
}

</mosaic_0001>

<llo_original>
// kernel: tpu_custom_call.1
$region0: #{tpu_custom_call.1}
  #allocation0 [shape = 'u32[]', space=smem, size = 0x4, offset = 0x4, fixed_abs, tag = 'smem constant byte address 0x4 - core index']
  #allocation1 [shape = 'u32[72,128]{1,0:T(1,128)}', space=vmem, size = 0x9000, scoped, tag = 'internal scratch']
  %s0 = inlined_call_operand.hbm [shape: f32[64,768], index: 0, kind: input, shape index: {}]
  %s1 = inlined_call_operand.hbm [shape: f32[768,768], index: 1, kind: input, shape index: {}]
  %s2 = inlined_call_operand.hbm [shape: f32[1,768], index: 2, kind: input, shape index: {}]
  %s3 = inlined_call_operand.hbm [shape: bf16[64,768], index: 3, kind: output, shape index: {}]
  %s4 = sld [smem:[#allocation0]]
  $region34: #{tpu_custom_call.1} parent=0
    _
  %s6 = ssub.s32 1, %s4
  %s7 = scalar_select 0, %s6, %s4
  $region1: #{tpu_custom_call.1} parent=0
    #allocation2 [shape = 'u8[196608]{0}', space=vmem, size = 0x30000, scoped, tag = 'input window, operand 0, single buffered']
    #allocation3 [shape = 's32[1]{0}', space=sflag, size = 0x4, scoped, tag = 'scoped memory for tpu_custom_call.1']
    #allocation4 [shape = 's32[1]{0}', space=sflag, size = 0x4, scoped, tag = 'scoped memory for tpu_custom_call.1']
    #allocation5 [shape = 'u8[2359296]{0}', space=vmem, size = 0x240000, scoped, tag = 'input window, operand 1, single buffered']
    #allocation6 [shape = 's32[1]{0}', space=sflag, size = 0x4, scoped, tag = 'scoped memory for tpu_custom_call.1']
    #allocation7 [shape = 'u8[3072]{0}', space=vmem, size = 0xc00, scoped, tag = 'input window, operand 2, single buffered']
    #allocation8 [shape = 'u8[98304]{0}', space=vmem, size = 0x18000, scoped, tag = 'output window, operand 0, single buffered']
    %8 = vsyncpa [#allocation3], 0
    %9 = vsyncpa [#allocation6], 0
    %10 = vsyncpa [#allocation4], 0
    // Predicated region
    $region2: #{tpu_custom_call.1} parent=1 // pred_check
      _
    $region3: #{tpu_custom_call.1} parent=1 // pred_check_branch
      %12 = sbr.rel (0) target = $region5
    $region4: #{tpu_custom_call.1} parent=1 // pred_region
      %14 = vsyncadd [#allocation3], 0
      %s15 = sshll.u32 %s0, 4
      %s16 = int_to_ptr.hbm [resolvable:$true] %s15
      %s17 = sshll.u32 [#allocation2], 4
      %s18 = int_to_ptr.vmem [resolvable:$true] %s17
      %23 = dma.hbm_to_vmem [thread:$0]  %s16, 6144, %s18, [#allocation3], 768, 768, 48
    $region5: #{tpu_custom_call.1} parent=1 // pred_fallthru
      _
    // Predicated region
    $region6: #{tpu_custom_call.1} parent=1 // pred_check
      _
    $region7: #{tpu_custom_call.1} parent=1 // pred_check_branch
      %25 = sbr.rel (0) target = $region9
    $region8: #{tpu_custom_call.1} parent=1 // pred_region
      %27 = vsyncadd [#allocation6], 0
      %s28 = sshll.u32 %s1, 4
      %s29 = int_to_ptr.hbm [resolvable:$true] %s28
      %s30 = sshll.u32 [#allocation5], 4
      %s31 = int_to_ptr.vmem [resolvable:$true] %s30
      %36 = dma.hbm_to_vmem [thread:$0]  %s29, 73728, %s31, [#allocation6], 768, 768, 48
    $region9: #{tpu_custom_call.1} parent=1 // pred_fallthru
      _
    // Predicated region
    $region10: #{tpu_custom_call.1} parent=1 // pred_check
      _
    $region11: #{tpu_custom_call.1} parent=1 // pred_check_branch
      %38 = sbr.rel (0) target = $region13
    $region12: #{tpu_custom_call.1} parent=1 // pred_region
      %40 = vsyncadd [#allocation6], 0
      %s42 = sshll.u32 %s2, 4
      %s43 = int_to_ptr.hbm [resolvable:$true] %s42
      %s44 = sshll.u32 [#allocation7], 4
      %s45 = int_to_ptr.vmem [resolvable:$true] %s44
      %47 = dma.hbm_to_vmem [thread:$0]  %s43, 96, %s45, [#allocation6]
    $region13: #{tpu_custom_call.1} parent=1 // pred_fallthru
      _
    // Predicated region
    $region14: #{tpu_custom_call.1} parent=1 // pred_check
      _
    $region15: #{tpu_custom_call.1} parent=1 // pred_check_branch
      %49 = sbr.rel (0) target = $region17
    $region16: #{tpu_custom_call.1} parent=1 // pred_region
      %51 = dma.done [#allocation3], 6144
    $region17: #{tpu_custom_call.1} parent=1 // pred_fallthru
      _
    // Predicated region
    $region18: #{tpu_custom_call.1} parent=1 // pred_check
      _
    $region19: #{tpu_custom_call.1} parent=1 // pred_check_branch
      %53 = sbr.rel (0) target = $region21
    $region20: #{tpu_custom_call.1} parent=1 // pred_region
      %55 = dma.done [#allocation6], 73728
    $region21: #{tpu_custom_call.1} parent=1 // pred_fallthru
      _
    // Predicated region
    $region22: #{tpu_custom_call.1} parent=1 // pred_check
      _
    $region23: #{tpu_custom_call.1} parent=1 // pred_check_branch
      %57 = sbr.rel (0) target = $region25
    $region24: #{tpu_custom_call.1} parent=1 // pred_region
      %59 = dma.done [#allocation6], 96
    $region25: #{tpu_custom_call.1} parent=1 // pred_fallthru
      _
    %v60 = vld [vmem:[#allocation2] sm:$0xff]
    %v61 = vld [vmem:[#allocation2 + $0x8] sm:$0xff]
    %v62 = vld [vmem:[#allocation2 + $0x10] sm:$0xff]
    %v63 = vld [vmem:[#allocation2 + $0x18] sm:$0xff]
    %v64 = vld [vmem:[#allocation2 + $0x20] sm:$0xff]
    %v65 = vld [vmem:[#allocation2 + $0x28] sm:$0xff]
    %v66 = vld [vmem:[#allocation2 + $0x30] sm:$0xff]
    %v67 = vld [vmem:[#allocation2 + $0x38] sm:$0xff]
    %v68 = vld [vmem:[#allocation2 + $0x40] sm:$0xff]
    %v69 = vld [vmem:[#allocation2 + $0x48] sm:$0xff]
    %v70 = vld [vmem:[#allocation2 + $0x50] sm:$0xff]
    %v71 = vld [vmem:[#allocation2 + $0x58] sm:$0xff]
    %v72 = vld [vmem:[#allocation2 + $0x60] sm:$0xff]
    %v73 = vld [vmem:[#allocation2 + $0x68] sm:$0xff]
    %v74 = vld [vmem:[#allocation2 + $0x70] sm:$0xff]
    %v75 = vld [vmem:[#allocation2 + $0x78] sm:$0xff]
    %v76 = vld [vmem:[#allocation2 + $0x80] sm:$0xff]
    %v77 = vld [vmem:[#allocation2 + $0x88] sm:$0xff]
    %v78 = vld [vmem:[#allocation2 + $0x90] sm:$0xff]
    %v79 = vld [vmem:[#allocation2 + $0x98] sm:$0xff]
    %v80 = vld [vmem:[#allocation2 + $0xa0] sm:$0xff]
    %v81 = vld [vmem:[#allocation2 + $0xa8] sm:$0xff]
    %v82 = vld [vmem:[#allocation2 + $0xb0] sm:$0xff]
    %v83 = vld [vmem:[#allocation2 + $0xb8] sm:$0xff]
    %v84 = vld [vmem:[#allocation2 + $0xc0] sm:$0xff]
    %v85 = vld [vmem:[#allocation2 + $0xc8] sm:$0xff]
    %v86 = vld [vmem:[#allocation2 + $0xd0] sm:$0xff]
    %v87 = vld [vmem:[#allocation2 + $0xd8] sm:$0xff]
    %v88 = vld [vmem:[#allocation2 + $0xe0] sm:$0xff]
    %v89 = vld [vmem:[#allocation2 + $0xe8] sm:$0xff]
    %v90 = vld [vmem:[#allocation2 + $0xf0] sm:$0xff]
    %v91 = vld [vmem:[#allocation2 + $0xf8] sm:$0xff]
    %v92 = vld [vmem:[#allocation2 + $0x100] sm:$0xff]
    %v93 = vld [vmem:[#allocation2 + $0x108] sm:$0xff]
    %v94 = vld [vmem:[#allocation2 + $0x110] sm:$0xff]
    %v95 = vld [vmem:[#allocation2 + $0x118] sm:$0xff]
    %v96 = vld [vmem:[#allocation2 + $0x120] sm:$0xff]
    %v97 = vld [vmem:[#allocation2 + $0x128] sm:$0xff]
    %v98 = vld [vmem:[#allocation2 + $0x130] sm:$0xff]
    %v99 = vld [vmem:[#allocation2 + $0x138] sm:$0xff]
    %v100 = vld [vmem:[#allocation2 + $0x140] sm:$0xff]
    %v101 = vld [vmem:[#allocation2 + $0x148] sm:$0xff]
    %v102 = vld [vmem:[#allocation2 + $0x150] sm:$0xff]
    %v103 = vld [vmem:[#allocation2 + $0x158] sm:$0xff]
    %v104 = vld [vmem:[#allocation2 + $0x160] sm:$0xff]
    %v105 = vld [vmem:[#allocation2 + $0x168] sm:$0xff]
    %v106 = vld [vmem:[#allocation2 + $0x170] sm:$0xff]
    %v107 = vld [vmem:[#allocation2 + $0x178] sm:$0xff]
    %v108 = vld [vmem:[#allocation5] sm:$0xff]
    %v109 = vld [vmem:[#allocation5 + $0x8] sm:$0xff]
    %v110 = vld [vmem:[#allocation5 + $0x10] sm:$0xff]
    %v111 = vld [vmem:[#allocation5 + $0x18] sm:$0xff]
    %v112 = vld [vmem:[#allocation5 + $0x20] sm:$0xff]
    %v113 = vld [vmem:[#allocation5 + $0x28] sm:$0xff]
    %v114 = vld [vmem:[#allocation5 + $0x30] sm:$0xff]
    %v115 = vld [vmem:[#allocation5 + $0x38] sm:$0xff]
    %v116 = vld [vmem:[#allocation5 + $0x40] sm:$0xff]
    %v117 = vld [vmem:[#allocation5 + $0x48] sm:$0xff]
    %v118 = vld [vmem:[#allocation5 + $0x50] sm:$0xff]
    %v119 = vld [vmem:[#allocation5 + $0x58] sm:$0xff]
    %v120 = vld [vmem:[#allocation5 + $0x60] sm:$0xff]
    %v121 = vld [vmem:[#allocation5 + $0x68] sm:$0xff]
    %v122 = vld [vmem:[#allocation5 + $0x70] sm:$0xff]
    %v123 = vld [vmem:[#allocation5 + $0x78] sm:$0xff]
    %v124 = vld [vmem:[#allocation5 + $0x80] sm:$0xff]
    %v125 = vld [vmem:[#allocation5 + $0x88] sm:$0xff]
    %v126 = vld [vmem:[#allocation5 + $0x90] sm:$0xff]
    %v127 = vld [vmem:[#allocation5 + $0x98] sm:$0xff]
    %v128 = vld [vmem:[#allocation5 + $0xa0] sm:$0xff]
    %v129 = vld [vmem:[#allocation5 + $0xa8] sm:$0xff]
    %v130 = vld [vmem:[#allocation5 + $0xb0] sm:$0xff]
    %v131 = vld [vmem:[#allocation5 + $0xb8] sm:$0xff]
    %v132 = vld [vmem:[#allocation5 + $0xc0] sm:$0xff]
    %v133 = vld [vmem:[#allocation5 + $0xc8] sm:$0xff]
    %v134 = vld [vmem:[#allocation5 + $0xd0] sm:$0xff]
    %v135 = vld [vmem:[#allocation5 + $0xd8] sm:$0xff]
    %v136 = vld [vmem:[#allocation5 + $0xe0] sm:$0xff]
    %v137 = vld [vmem:[#allocation5 + $0xe8] sm:$0xff]
    %v138 = vld [vmem:[#allocation5 + $0xf0] sm:$0xff]
    %v139 = vld [vmem:[#allocation5 + $0xf8] sm:$0xff]
    %v140 = vld [vmem:[#allocation5 + $0x100] sm:$0xff]
    %v141 = vld [vmem:[#allocation5 + $0x108] sm:$0xff]
    %v142 = vld [vmem:[#allocation5 + $0x110] sm:$0xff]
    %v143 = vld [vmem:[#allocation5 + $0x118] sm:$0xff]
    %v144 = vld [vmem:[#allocation5 + $0x120] sm:$0xff]
    %v145 = vld [vmem:[#allocation5 + $0x128] sm:$0xff]
    %v146 = vld [vmem:[#allocation5 + $0x130] sm:$0xff]
    %v147 = vld [vmem:[#allocation5 + $0x138] sm:$0xff]
    %v148 = vld [vmem:[#allocation5 + $0x140] sm:$0xff]
    %v149 = vld [vmem:[#allocation5 + $0x148] sm:$0xff]
    %v150 = vld [vmem:[#allocation5 + $0x150] sm:$0xff]
    %v151 = vld [vmem:[#allocation5 + $0x158] sm:$0xff]
    %v152 = vld [vmem:[#allocation5 + $0x160] sm:$0xff]
    %v153 = vld [vmem:[#allocation5 + $0x168] sm:$0xff]
    %v154 = vld [vmem:[#allocation5 + $0x170] sm:$0xff]
    %v155 = vld [vmem:[#allocation5 + $0x178] sm:$0xff]
    %v156 = vld [vmem:[#allocation5 + $0x180] sm:$0xff]
    %v157 = vld [vmem:[#allocation5 + $0x188] sm:$0xff]
    %v158 = vld [vmem:[#allocation5 + $0x190] sm:$0xff]
    %v159 = vld [vmem:[#allocation5 + $0x198] sm:$0xff]
    %v160 = vld [vmem:[#allocation5 + $0x1a0] sm:$0xff]
    %v161 = vld [vmem:[#allocation5 + $0x1a8] sm:$0xff]
    %v162 = vld [vmem:[#allocation5 + $0x1b0] sm:$0xff]
    %v163 = vld [vmem:[#allocation5 + $0x1b8] sm:$0xff]
    %v164 = vld [vmem:[#allocation5 + $0x1c0] sm:$0xff]
    %v165 = vld [vmem:[#allocation5 + $0x1c8] sm:$0xff]
    %v166 = vld [vmem:[#allocation5 + $0x1d0] sm:$0xff]
    %v167 = vld [vmem:[#allocation5 + $0x1d8] sm:$0xff]
    %v168 = vld [vmem:[#allocation5 + $0x1e0] sm:$0xff]
    %v169 = vld [vmem:[#allocation5 + $0x1e8] sm:$0xff]
    %v170 = vld [vmem:[#allocation5 + $0x1f0] sm:$0xff]
    %v171 = vld [vmem:[#allocation5 + $0x1f8] sm:$0xff]
    %v172 = vld [vmem:[#allocation5 + $0x200] sm:$0xff]
    %v173 = vld [vmem:[#allocation5 + $0x208] sm:$0xff]
    %v174 = vld [vmem:[#allocation5 + $0x210] sm:$0xff]
    %v175 = vld [vmem:[#allocation5 + $0x218] sm:$0xff]
    %v176 = vld [vmem:[#allocation5 + $0x220] sm:$0xff]
    %v177 = vld [vmem:[#allocation5 + $0x228] sm:$0xff]
    %v178 = vld [vmem:[#allocation5 + $0x230] sm:$0xff]
    %v179 = vld [vmem:[#allocation5 + $0x238] sm:$0xff]
    %v180 = vld [vmem:[#allocation5 + $0x240] sm:$0xff]
    %v181 = vld [vmem:[#allocation5 + $0x248] sm:$0xff]
    %v182 = vld [vmem:[#allocation5 + $0x250] sm:$0xff]
    %v183 = vld [vmem:[#allocation5 + $0x258] sm:$0xff]
    %v184 = vld [vmem:[#allocation5 + $0x260] sm:$0xff]
    %v185 = vld [vmem:[#allocation5 + $0x268] sm:$0xff]
    %v186 = vld [vmem:[#allocation5 + $0x270] sm:$0xff]
    %v187 = vld [vmem:[#allocation5 + $0x278] sm:$0xff]
    %v188 = vld [vmem:[#allocation5 + $0x280] sm:$0xff]
    %v189 = vld [vmem:[#allocation5 + $0x288] sm:$0xff]
    %v190 = vld [vmem:[#allocation5 + $0x290] sm:$0xff]
    %v191 = vld [vmem:[#allocation5 + $0x298] sm:$0xff]
    %v192 = vld [vmem:[#allocation5 + $0x2a0] sm:$0xff]
    %v193 = vld [vmem:[#allocation5 + $0x2a8] sm:$0xff]
    %v194 = vld [vmem:[#allocation5 + $0x2b0] sm:$0xff]
    %v195 = vld [vmem:[#allocation5 + $0x2b8] sm:$0xff]
    %v196 = vld [vmem:[#allocation5 + $0x2c0] sm:$0xff]
    %v197 = vld [vmem:[#allocation5 + $0x2c8] sm:$0xff]
    %v198 = vld [vmem:[#allocation5 + $0x2d0] sm:$0xff]
    %v199 = vld [vmem:[#allocation5 + $0x2d8] sm:$0xff]
    %v200 = vld [vmem:[#allocation5 + $0x2e0] sm:$0xff]
    %v201 = vld [vmem:[#allocation5 + $0x2e8] sm:$0xff]
    %v202 = vld [vmem:[#allocation5 + $0x2f0] sm:$0xff]
    %v203 = vld [vmem:[#allocation5 + $0x2f8] sm:$0xff]
    %v204 = vld [vmem:[#allocation5 + $0x300] sm:$0xff]
    %v205 = vld [vmem:[#allocation5 + $0x308] sm:$0xff]
    %v206 = vld [vmem:[#allocation5 + $0x310] sm:$0xff]
    %v207 = vld [vmem:[#allocation5 + $0x318] sm:$0xff]
    %v208 = vld [vmem:[#allocation5 + $0x320] sm:$0xff]
    %v209 = vld [vmem:[#allocation5 + $0x328] sm:$0xff]
    %v210 = vld [vmem:[#allocation5 + $0x330] sm:$0xff]
    %v211 = vld [vmem:[#allocation5 + $0x338] sm:$0xff]
    %v212 = vld [vmem:[#allocation5 + $0x340] sm:$0xff]
    %v213 = vld [vmem:[#allocation5 + $0x348] sm:$0xff]
    %v214 = vld [vmem:[#allocation5 + $0x350] sm:$0xff]
    %v215 = vld [vmem:[#allocation5 + $0x358] sm:$0xff]
    %v216 = vld [vmem:[#allocation5 + $0x360] sm:$0xff]
    %v217 = vld [vmem:[#allocation5 + $0x368] sm:$0xff]
    %v218 = vld [vmem:[#allocation5 + $0x370] sm:$0xff]
    %v219 = vld [vmem:[#allocation5 + $0x378] sm:$0xff]
    %v220 = vld [vmem:[#allocation5 + $0x380] sm:$0xff]
    %v221 = vld [vmem:[#allocation5 + $0x388] sm:$0xff]
    %v222 = vld [vmem:[#allocation5 + $0x390] sm:$0xff]
    %v223 = vld [vmem:[#allocation5 + $0x398] sm:$0xff]
    %v224 = vld [vmem:[#allocation5 + $0x3a0] sm:$0xff]
    %v225 = vld [vmem:[#allocation5 + $0x3a8] sm:$0xff]
    %v226 = vld [vmem:[#allocation5 + $0x3b0] sm:$0xff]
    %v227 = vld [vmem:[#allocation5 + $0x3b8] sm:$0xff]
    %v228 = vld [vmem:[#allocation5 + $0x3c0] sm:$0xff]
    %v229 = vld [vmem:[#allocation5 + $0x3c8] sm:$0xff]
    %v230 = vld [vmem:[#allocation5 + $0x3d0] sm:$0xff]
    %v231 = vld [vmem:[#allocation5 + $0x3d8] sm:$0xff]
    %v232 = vld [vmem:[#allocation5 + $0x3e0] sm:$0xff]
    %v233 = vld [vmem:[#allocation5 + $0x3e8] sm:$0xff]
    %v234 = vld [vmem:[#allocation5 + $0x3f0] sm:$0xff]
    %v235 = vld [vmem:[#allocation5 + $0x3f8] sm:$0xff]
    %v236 = vld [vmem:[#allocation5 + $0x400] sm:$0xff]
    %v237 = vld [vmem:[#allocation5 + $0x408] sm:$0xff]
    %v238 = vld [vmem:[#allocation5 + $0x410] sm:$0xff]
    %v239 = vld [vmem:[#allocation5 + $0x418] sm:$0xff]
    %v240 = vld [vmem:[#allocation5 + $0x420] sm:$0xff]
    %v241 = vld [vmem:[#allocation5 + $0x428] sm:$0xff]
    %v242 = vld [vmem:[#allocation5 + $0x430] sm:$0xff]
    %v243 = vld [vmem:[#allocation5 + $0x438] sm:$0xff]
    %v244 = vld [vmem:[#allocation5 + $0x440] sm:$0xff]
    %v245 = vld [vmem:[#allocation5 + $0x448] sm:$0xff]
    %v246 = vld [vmem:[#allocation5 + $0x450] sm:$0xff]
    %v247 = vld [vmem:[#allocation5 + $0x458] sm:$0xff]
    %v248 = vld [vmem:[#allocation5 + $0x460] sm:$0xff]
    %v249 = vld [vmem:[#allocation5 + $0x468] sm:$0xff]
    %v250 = vld [vmem:[#allocation5 + $0x470] sm:$0xff]
    %v251 = vld [vmem:[#allocation5 + $0x478] sm:$0xff]
    %v252 = vld [vmem:[#allocation5 + $0x480] sm:$0xff]
    %v253 = vld [vmem:[#allocation5 + $0x488] sm:$0xff]
    %v254 = vld [vmem:[#allocation5 + $0x490] sm:$0xff]
    %v255 = vld [vmem:[#allocation5 + $0x498] sm:$0xff]
    %v256 = vld [vmem:[#allocation5 + $0x4a0] sm:$0xff]
    %v257 = vld [vmem:[#allocation5 + $0x4a8] sm:$0xff]
    %v258 = vld [vmem:[#allocation5 + $0x4b0] sm:$0xff]
    %v259 = vld [vmem:[#allocation5 + $0x4b8] sm:$0xff]
    %v260 = vld [vmem:[#allocation5 + $0x4c0] sm:$0xff]
    %v261 = vld [vmem:[#allocation5 + $0x4c8] sm:$0xff]
    %v262 = vld [vmem:[#allocation5 + $0x4d0] sm:$0xff]
    %v263 = vld [vmem:[#allocation5 + $0x4d8] sm:$0xff]
    %v264 = vld [vmem:[#allocation5 + $0x4e0] sm:$0xff]
    %v265 = vld [vmem:[#allocation5 + $0x4e8] sm:$0xff]
    %v266 = vld [vmem:[#allocation5 + $0x4f0] sm:$0xff]
    %v267 = vld [vmem:[#allocation5 + $0x4f8] sm:$0xff]
    %v268 = vld [vmem:[#allocation5 + $0x500] sm:$0xff]
    %v269 = vld [vmem:[#allocation5 + $0x508] sm:$0xff]
    %v270 = vld [vmem:[#allocation5 + $0x510] sm:$0xff]
    %v271 = vld [vmem:[#allocation5 + $0x518] sm:$0xff]
    %v272 = vld [vmem:[#allocation5 + $0x520] sm:$0xff]
    %v273 = vld [vmem:[#allocation5 + $0x528] sm:$0xff]
    %v274 = vld [vmem:[#allocation5 + $0x530] sm:$0xff]
    %v275 = vld [vmem:[#allocation5 + $0x538] sm:$0xff]
    %v276 = vld [vmem:[#allocation5 + $0x540] sm:$0xff]
    %v277 = vld [vmem:[#allocation5 + $0x548] sm:$0xff]
    %v278 = vld [vmem:[#allocation5 + $0x550] sm:$0xff]
    %v279 = vld [vmem:[#allocation5 + $0x558] sm:$0xff]
    %v280 = vld [vmem:[#allocation5 + $0x560] sm:$0xff]
    %v281 = vld [vmem:[#allocation5 + $0x568] sm:$0xff]
    %v282 = vld [vmem:[#allocation5 + $0x570] sm:$0xff]
    %v283 = vld [vmem:[#allocation5 + $0x578] sm:$0xff]
    %v284 = vld [vmem:[#allocation5 + $0x580] sm:$0xff]
    %v285 = vld [vmem:[#allocation5 + $0x588] sm:$0xff]
    %v286 = vld [vmem:[#allocation5 + $0x590] sm:$0xff]
    %v287 = vld [vmem:[#allocation5 + $0x598] sm:$0xff]
    %v288 = vld [vmem:[#allocation5 + $0x5a0] sm:$0xff]
    %v289 = vld [vmem:[#allocation5 + $0x5a8] sm:$0xff]
    %v290 = vld [vmem:[#allocation5 + $0x5b0] sm:$0xff]
    %v291 = vld [vmem:[#allocation5 + $0x5b8] sm:$0xff]
    %v292 = vld [vmem:[#allocation5 + $0x5c0] sm:$0xff]
    %v293 = vld [vmem:[#allocation5 + $0x5c8] sm:$0xff]
    %v294 = vld [vmem:[#allocation5 + $0x5d0] sm:$0xff]
    %v295 = vld [vmem:[#allocation5 + $0x5d8] sm:$0xff]
    %v296 = vld [vmem:[#allocation5 + $0x5e0] sm:$0xff]
    %v297 = vld [vmem:[#allocation5 + $0x5e8] sm:$0xff]
    %v298 = vld [vmem:[#allocation5 + $0x5f0] sm:$0xff]
    %v299 = vld [vmem:[#allocation5 + $0x5f8] sm:$0xff]
    %v300 = vld [vmem:[#allocation5 + $0x600] sm:$0xff]
    %v301 = vld [vmem:[#allocation5 + $0x608] sm:$0xff]
    %v302 = vld [vmem:[#allocation5 + $0x610] sm:$0xff]
    %v303 = vld [vmem:[#allocation5 + $0x618] sm:$0xff]
    %v304 = vld [vmem:[#allocation5 + $0x620] sm:$0xff]
    %v305 = vld [vmem:[#allocation5 + $0x628] sm:$0xff]
    %v306 = vld [vmem:[#allocation5 + $0x630] sm:$0xff]
    %v307 = vld [vmem:[#allocation5 + $0x638] sm:$0xff]
    %v308 = vld [vmem:[#allocation5 + $0x640] sm:$0xff]
    %v309 = vld [vmem:[#allocation5 + $0x648] sm:$0xff]
    %v310 = vld [vmem:[#allocation5 + $0x650] sm:$0xff]
    %v311 = vld [vmem:[#allocation5 + $0x658] sm:$0xff]
    %v312 = vld [vmem:[#allocation5 + $0x660] sm:$0xff]
    %v313 = vld [vmem:[#allocation5 + $0x668] sm:$0xff]
    %v314 = vld [vmem:[#allocation5 + $0x670] sm:$0xff]
    %v315 = vld [vmem:[#allocation5 + $0x678] sm:$0xff]
    %v316 = vld [vmem:[#allocation5 + $0x680] sm:$0xff]
    %v317 = vld [vmem:[#allocation5 + $0x688] sm:$0xff]
    %v318 = vld [vmem:[#allocation5 + $0x690] sm:$0xff]
    %v319 = vld [vmem:[#allocation5 + $0x698] sm:$0xff]
    %v320 = vld [vmem:[#allocation5 + $0x6a0] sm:$0xff]
    %v321 = vld [vmem:[#allocation5 + $0x6a8] sm:$0xff]
    %v322 = vld [vmem:[#allocation5 + $0x6b0] sm:$0xff]
    %v323 = vld [vmem:[#allocation5 + $0x6b8] sm:$0xff]
    %v324 = vld [vmem:[#allocation5 + $0x6c0] sm:$0xff]
    %v325 = vld [vmem:[#allocation5 + $0x6c8] sm:$0xff]
    %v326 = vld [vmem:[#allocation5 + $0x6d0] sm:$0xff]
    %v327 = vld [vmem:[#allocation5 + $0x6d8] sm:$0xff]
    %v328 = vld [vmem:[#allocation5 + $0x6e0] sm:$0xff]
    %v329 = vld [vmem:[#allocation5 + $0x6e8] sm:$0xff]
    %v330 = vld [vmem:[#allocation5 + $0x6f0] sm:$0xff]
    %v331 = vld [vmem:[#allocation5 + $0x6f8] sm:$0xff]
    %v332 = vld [vmem:[#allocation5 + $0x700] sm:$0xff]
    %v333 = vld [vmem:[#allocation5 + $0x708] sm:$0xff]
    %v334 = vld [vmem:[#allocation5 + $0x710] sm:$0xff]
    %v335 = vld [vmem:[#allocation5 + $0x718] sm:$0xff]
    %v336 = vld [vmem:[#allocation5 + $0x720] sm:$0xff]
    %v337 = vld [vmem:[#allocation5 + $0x728] sm:$0xff]
    %v338 = vld [vmem:[#allocation5 + $0x730] sm:$0xff]
    %v339 = vld [vmem:[#allocation5 + $0x738] sm:$0xff]
    %v340 = vld [vmem:[#allocation5 + $0x740] sm:$0xff]
    %v341 = vld [vmem:[#allocation5 + $0x748] sm:$0xff]
    %v342 = vld [vmem:[#allocation5 + $0x750] sm:$0xff]
    %v343 = vld [vmem:[#allocation5 + $0x758] sm:$0xff]
    %v344 = vld [vmem:[#allocation5 + $0x760] sm:$0xff]
    %v345 = vld [vmem:[#allocation5 + $0x768] sm:$0xff]
    %v346 = vld [vmem:[#allocation5 + $0x770] sm:$0xff]
    %v347 = vld [vmem:[#allocation5 + $0x778] sm:$0xff]
    %v348 = vld [vmem:[#allocation5 + $0x780] sm:$0xff]
    %v349 = vld [vmem:[#allocation5 + $0x788] sm:$0xff]
    %v350 = vld [vmem:[#allocation5 + $0x790] sm:$0xff]
    %v351 = vld [vmem:[#allocation5 + $0x798] sm:$0xff]
    %v352 = vld [vmem:[#allocation5 + $0x7a0] sm:$0xff]
    %v353 = vld [vmem:[#allocation5 + $0x7a8] sm:$0xff]
    %v354 = vld [vmem:[#allocation5 + $0x7b0] sm:$0xff]
    %v355 = vld [vmem:[#allocation5 + $0x7b8] sm:$0xff]
    %v356 = vld [vmem:[#allocation5 + $0x7c0] sm:$0xff]
    %v357 = vld [vmem:[#allocation5 + $0x7c8] sm:$0xff]
    %v358 = vld [vmem:[#allocation5 + $0x7d0] sm:$0xff]
    %v359 = vld [vmem:[#allocation5 + $0x7d8] sm:$0xff]
    %v360 = vld [vmem:[#allocation5 + $0x7e0] sm:$0xff]
    %v361 = vld [vmem:[#allocation5 + $0x7e8] sm:$0xff]
    %v362 = vld [vmem:[#allocation5 + $0x7f0] sm:$0xff]
    %v363 = vld [vmem:[#allocation5 + $0x7f8] sm:$0xff]
    %v364 = vld [vmem:[#allocation5 + $0x800] sm:$0xff]
    %v365 = vld [vmem:[#allocation5 + $0x808] sm:$0xff]
    %v366 = vld [vmem:[#allocation5 + $0x810] sm:$0xff]
    %v367 = vld [vmem:[#allocation5 + $0x818] sm:$0xff]
    %v368 = vld [vmem:[#allocation5 + $0x820] sm:$0xff]
    %v369 = vld [vmem:[#allocation5 + $0x828] sm:$0xff]
    %v370 = vld [vmem:[#allocation5 + $0x830] sm:$0xff]
    %v371 = vld [vmem:[#allocation5 + $0x838] sm:$0xff]
    %v372 = vld [vmem:[#allocation5 + $0x840] sm:$0xff]
    %v373 = vld [vmem:[#allocation5 + $0x848] sm:$0xff]
    %v374 = vld [vmem:[#allocation5 + $0x850] sm:$0xff]
    %v375 = vld [vmem:[#allocation5 + $0x858] sm:$0xff]
    %v376 = vld [vmem:[#allocation5 + $0x860] sm:$0xff]
    %v377 = vld [vmem:[#allocation5 + $0x868] sm:$0xff]
    %v378 = vld [vmem:[#allocation5 + $0x870] sm:$0xff]
    %v379 = vld [vmem:[#allocation5 + $0x878] sm:$0xff]
    %v380 = vld [vmem:[#allocation5 + $0x880] sm:$0xff]
    %v381 = vld [vmem:[#allocation5 + $0x888] sm:$0xff]
    %v382 = vld [vmem:[#allocation5 + $0x890] sm:$0xff]
    %v383 = vld [vmem:[#allocation5 + $0x898] sm:$0xff]
    %v384 = vld [vmem:[#allocation5 + $0x8a0] sm:$0xff]
    %v385 = vld [vmem:[#allocation5 + $0x8a8] sm:$0xff]
    %v386 = vld [vmem:[#allocation5 + $0x8b0] sm:$0xff]
    %v387 = vld [vmem:[#allocation5 + $0x8b8] sm:$0xff]
    %v388 = vld [vmem:[#allocation5 + $0x8c0] sm:$0xff]
    %v389 = vld [vmem:[#allocation5 + $0x8c8] sm:$0xff]
    %v390 = vld [vmem:[#allocation5 + $0x8d0] sm:$0xff]
    %v391 = vld [vmem:[#allocation5 + $0x8d8] sm:$0xff]
    %v392 = vld [vmem:[#allocation5 + $0x8e0] sm:$0xff]
    %v393 = vld [vmem:[#allocation5 + $0x8e8] sm:$0xff]
    %v394 = vld [vmem:[#allocation5 + $0x8f0] sm:$0xff]
    %v395 = vld [vmem:[#allocation5 + $0x8f8] sm:$0xff]
    %v396 = vld [vmem:[#allocation5 + $0x900] sm:$0xff]
    %v397 = vld [vmem:[#allocation5 + $0x908] sm:$0xff]
    %v398 = vld [vmem:[#allocation5 + $0x910] sm:$0xff]
    %v399 = vld [vmem:[#allocation5 + $0x918] sm:$0xff]
    %v400 = vld [vmem:[#allocation5 + $0x920] sm:$0xff]
    %v401 = vld [vmem:[#allocation5 + $0x928] sm:$0xff]
    %v402 = vld [vmem:[#allocation5 + $0x930] sm:$0xff]
    %v403 = vld [vmem:[#allocation5 + $0x938] sm:$0xff]
    %v404 = vld [vmem:[#allocation5 + $0x940] sm:$0xff]
    %v405 = vld [vmem:[#allocation5 + $0x948] sm:$0xff]
    %v406 = vld [vmem:[#allocation5 + $0x950] sm:$0xff]
    %v407 = vld [vmem:[#allocation5 + $0x958] sm:$0xff]
    %v408 = vld [vmem:[#allocation5 + $0x960] sm:$0xff]
    %v409 = vld [vmem:[#allocation5 + $0x968] sm:$0xff]
    %v410 = vld [vmem:[#allocation5 + $0x970] sm:$0xff]
    %v411 = vld [vmem:[#allocation5 + $0x978] sm:$0xff]
    %v412 = vld [vmem:[#allocation5 + $0x980] sm:$0xff]
    %v413 = vld [vmem:[#allocation5 + $0x988] sm:$0xff]
    %v414 = vld [vmem:[#allocation5 + $0x990] sm:$0xff]
    %v415 = vld [vmem:[#allocation5 + $0x998] sm:$0xff]
    %v416 = vld [vmem:[#allocation5 + $0x9a0] sm:$0xff]
    %v417 = vld [vmem:[#allocation5 + $0x9a8] sm:$0xff]
    %v418 = vld [vmem:[#allocation5 + $0x9b0] sm:$0xff]
    %v419 = vld [vmem:[#allocation5 + $0x9b8] sm:$0xff]
    %v420 = vld [vmem:[#allocation5 + $0x9c0] sm:$0xff]
    %v421 = vld [vmem:[#allocation5 + $0x9c8] sm:$0xff]
    %v422 = vld [vmem:[#allocation5 + $0x9d0] sm:$0xff]
    %v423 = vld [vmem:[#allocation5 + $0x9d8] sm:$0xff]
    %v424 = vld [vmem:[#allocation5 + $0x9e0] sm:$0xff]
    %v425 = vld [vmem:[#allocation5 + $0x9e8] sm:$0xff]
    %v426 = vld [vmem:[#allocation5 + $0x9f0] sm:$0xff]
    %v427 = vld [vmem:[#allocation5 + $0x9f8] sm:$0xff]
    %v428 = vld [vmem:[#allocation5 + $0xa00] sm:$0xff]
    %v429 = vld [vmem:[#allocation5 + $0xa08] sm:$0xff]
    %v430 = vld [vmem:[#allocation5 + $0xa10] sm:$0xff]
    %v431 = vld [vmem:[#allocation5 + $0xa18] sm:$0xff]
    %v432 = vld [vmem:[#allocation5 + $0xa20] sm:$0xff]
    %v433 = vld [vmem:[#allocation5 + $0xa28] sm:$0xff]
    %v434 = vld [vmem:[#allocation5 + $0xa30] sm:$0xff]
    %v435 = vld [vmem:[#allocation5 + $0xa38] sm:$0xff]
    %v436 = vld [vmem:[#allocation5 + $0xa40] sm:$0xff]
    %v437 = vld [vmem:[#allocation5 + $0xa48] sm:$0xff]
    %v438 = vld [vmem:[#allocation5 + $0xa50] sm:$0xff]
    %v439 = vld [vmem:[#allocation5 + $0xa58] sm:$0xff]
    %v440 = vld [vmem:[#allocation5 + $0xa60] sm:$0xff]
    %v441 = vld [vmem:[#allocation5 + $0xa68] sm:$0xff]
    %v442 = vld [vmem:[#allocation5 + $0xa70] sm:$0xff]
    %v443 = vld [vmem:[#allocation5 + $0xa78] sm:$0xff]
    %v444 = vld [vmem:[#allocation5 + $0xa80] sm:$0xff]
    %v445 = vld [vmem:[#allocation5 + $0xa88] sm:$0xff]
    %v446 = vld [vmem:[#allocation5 + $0xa90] sm:$0xff]
    %v447 = vld [vmem:[#allocation5 + $0xa98] sm:$0xff]
    %v448 = vld [vmem:[#allocation5 + $0xaa0] sm:$0xff]
    %v449 = vld [vmem:[#allocation5 + $0xaa8] sm:$0xff]
    %v450 = vld [vmem:[#allocation5 + $0xab0] sm:$0xff]
    %v451 = vld [vmem:[#allocation5 + $0xab8] sm:$0xff]
    %v452 = vld [vmem:[#allocation5 + $0xac0] sm:$0xff]
    %v453 = vld [vmem:[#allocation5 + $0xac8] sm:$0xff]
    %v454 = vld [vmem:[#allocation5 + $0xad0] sm:$0xff]
    %v455 = vld [vmem:[#allocation5 + $0xad8] sm:$0xff]
    %v456 = vld [vmem:[#allocation5 + $0xae0] sm:$0xff]
    %v457 = vld [vmem:[#allocation5 + $0xae8] sm:$0xff]
    %v458 = vld [vmem:[#allocation5 + $0xaf0] sm:$0xff]
    %v459 = vld [vmem:[#allocation5 + $0xaf8] sm:$0xff]
    %v460 = vld [vmem:[#allocation5 + $0xb00] sm:$0xff]
    %v461 = vld [vmem:[#allocation5 + $0xb08] sm:$0xff]
    %v462 = vld [vmem:[#allocation5 + $0xb10] sm:$0xff]
    %v463 = vld [vmem:[#allocation5 + $0xb18] sm:$0xff]
    %v464 = vld [vmem:[#allocation5 + $0xb20] sm:$0xff]
    %v465 = vld [vmem:[#allocation5 + $0xb28] sm:$0xff]
    %v466 = vld [vmem:[#allocation5 + $0xb30] sm:$0xff]
    %v467 = vld [vmem:[#allocation5 + $0xb38] sm:$0xff]
    %v468 = vld [vmem:[#allocation5 + $0xb40] sm:$0xff]
    %v469 = vld [vmem:[#allocation5 + $0xb48] sm:$0xff]
    %v470 = vld [vmem:[#allocation5 + $0xb50] sm:$0xff]
    %v471 = vld [vmem:[#allocation5 + $0xb58] sm:$0xff]
    %v472 = vld [vmem:[#allocation5 + $0xb60] sm:$0xff]
    %v473 = vld [vmem:[#allocation5 + $0xb68] sm:$0xff]
    %v474 = vld [vmem:[#allocation5 + $0xb70] sm:$0xff]
    %v475 = vld [vmem:[#allocation5 + $0xb78] sm:$0xff]
    %v476 = vld [vmem:[#allocation5 + $0xb80] sm:$0xff]
    %v477 = vld [vmem:[#allocation5 + $0xb88] sm:$0xff]
    %v478 = vld [vmem:[#allocation5 + $0xb90] sm:$0xff]
    %v479 = vld [vmem:[#allocation5 + $0xb98] sm:$0xff]
    %v480 = vld [vmem:[#allocation5 + $0xba0] sm:$0xff]
    %v481 = vld [vmem:[#allocation5 + $0xba8] sm:$0xff]
    %v482 = vld [vmem:[#allocation5 + $0xbb0] sm:$0xff]
    %v483 = vld [vmem:[#allocation5 + $0xbb8] sm:$0xff]
    %v484 = vld [vmem:[#allocation5 + $0xbc0] sm:$0xff]
    %v485 = vld [vmem:[#allocation5 + $0xbc8] sm:$0xff]
    %v486 = vld [vmem:[#allocation5 + $0xbd0] sm:$0xff]
    %v487 = vld [vmem:[#allocation5 + $0xbd8] sm:$0xff]
    %v488 = vld [vmem:[#allocation5 + $0xbe0] sm:$0xff]
    %v489 = vld [vmem:[#allocation5 + $0xbe8] sm:$0xff]
    %v490 = vld [vmem:[#allocation5 + $0xbf0] sm:$0xff]
    %v491 = vld [vmem:[#allocation5 + $0xbf8] sm:$0xff]
    %v492 = vld [vmem:[#allocation5 + $0xc00] sm:$0xff]
    %v493 = vld [vmem:[#allocation5 + $0xc08] sm:$0xff]
    %v494 = vld [vmem:[#allocation5 + $0xc10] sm:$0xff]
    %v495 = vld [vmem:[#allocation5 + $0xc18] sm:$0xff]
    %v496 = vld [vmem:[#allocation5 + $0xc20] sm:$0xff]
    %v497 = vld [vmem:[#allocation5 + $0xc28] sm:$0xff]
    %v498 = vld [vmem:[#allocation5 + $0xc30] sm:$0xff]
    %v499 = vld [vmem:[#allocation5 + $0xc38] sm:$0xff]
    %v500 = vld [vmem:[#allocation5 + $0xc40] sm:$0xff]
    %v501 = vld [vmem:[#allocation5 + $0xc48] sm:$0xff]
    %v502 = vld [vmem:[#allocation5 + $0xc50] sm:$0xff]
    %v503 = vld [vmem:[#allocation5 + $0xc58] sm:$0xff]
    %v504 = vld [vmem:[#allocation5 + $0xc60] sm:$0xff]
    %v505 = vld [vmem:[#allocation5 + $0xc68] sm:$0xff]
    %v506 = vld [vmem:[#allocation5 + $0xc70] sm:$0xff]
    %v507 = vld [vmem:[#allocation5 + $0xc78] sm:$0xff]
    %v508 = vld [vmem:[#allocation5 + $0xc80] sm:$0xff]
    %v509 = vld [vmem:[#allocation5 + $0xc88] sm:$0xff]
    %v510 = vld [vmem:[#allocation5 + $0xc90] sm:$0xff]
    %v511 = vld [vmem:[#allocation5 + $0xc98] sm:$0xff]
    %v512 = vld [vmem:[#allocation5 + $0xca0] sm:$0xff]
    %v513 = vld [vmem:[#allocation5 + $0xca8] sm:$0xff]
    %v514 = vld [vmem:[#allocation5 + $0xcb0] sm:$0xff]
    %v515 = vld [vmem:[#allocation5 + $0xcb8] sm:$0xff]
    %v516 = vld [vmem:[#allocation5 + $0xcc0] sm:$0xff]
    %v517 = vld [vmem:[#allocation5 + $0xcc8] sm:$0xff]
    %v518 = vld [vmem:[#allocation5 + $0xcd0] sm:$0xff]
    %v519 = vld [vmem:[#allocation5 + $0xcd8] sm:$0xff]
    %v520 = vld [vmem:[#allocation5 + $0xce0] sm:$0xff]
    %v521 = vld [vmem:[#allocation5 + $0xce8] sm:$0xff]
    %v522 = vld [vmem:[#allocation5 + $0xcf0] sm:$0xff]
    %v523 = vld [vmem:[#allocation5 + $0xcf8] sm:$0xff]
    %v524 = vld [vmem:[#allocation5 + $0xd00] sm:$0xff]
    %v525 = vld [vmem:[#allocation5 + $0xd08] sm:$0xff]
    %v526 = vld [vmem:[#allocation5 + $0xd10] sm:$0xff]
    %v527 = vld [vmem:[#allocation5 + $0xd18] sm:$0xff]
    %v528 = vld [vmem:[#allocation5 + $0xd20] sm:$0xff]
    %v529 = vld [vmem:[#allocation5 + $0xd28] sm:$0xff]
    %v530 = vld [vmem:[#allocation5 + $0xd30] sm:$0xff]
    %v531 = vld [vmem:[#allocation5 + $0xd38] sm:$0xff]
    %v532 = vld [vmem:[#allocation5 + $0xd40] sm:$0xff]
    %v533 = vld [vmem:[#allocation5 + $0xd48] sm:$0xff]
    %v534 = vld [vmem:[#allocation5 + $0xd50] sm:$0xff]
    %v535 = vld [vmem:[#allocation5 + $0xd58] sm:$0xff]
    %v536 = vld [vmem:[#allocation5 + $0xd60] sm:$0xff]
    %v537 = vld [vmem:[#allocation5 + $0xd68] sm:$0xff]
    %v538 = vld [vmem:[#allocation5 + $0xd70] sm:$0xff]
    %v539 = vld [vmem:[#allocation5 + $0xd78] sm:$0xff]
    %v540 = vld [vmem:[#allocation5 + $0xd80] sm:$0xff]
    %v541 = vld [vmem:[#allocation5 + $0xd88] sm:$0xff]
    %v542 = vld [vmem:[#allocation5 + $0xd90] sm:$0xff]
    %v543 = vld [vmem:[#allocation5 + $0xd98] sm:$0xff]
    %v544 = vld [vmem:[#allocation5 + $0xda0] sm:$0xff]
    %v545 = vld [vmem:[#allocation5 + $0xda8] sm:$0xff]
    %v546 = vld [vmem:[#allocation5 + $0xdb0] sm:$0xff]
    %v547 = vld [vmem:[#allocation5 + $0xdb8] sm:$0xff]
    %v548 = vld [vmem:[#allocation5 + $0xdc0] sm:$0xff]
    %v549 = vld [vmem:[#allocation5 + $0xdc8] sm:$0xff]
    %v550 = vld [vmem:[#allocation5 + $0xdd0] sm:$0xff]
    %v551 = vld [vmem:[#allocation5 + $0xdd8] sm:$0xff]
    %v552 = vld [vmem:[#allocation5 + $0xde0] sm:$0xff]
    %v553 = vld [vmem:[#allocation5 + $0xde8] sm:$0xff]
    %v554 = vld [vmem:[#allocation5 + $0xdf0] sm:$0xff]
    %v555 = vld [vmem:[#allocation5 + $0xdf8] sm:$0xff]
    %v556 = vld [vmem:[#allocation5 + $0xe00] sm:$0xff]
    %v557 = vld [vmem:[#allocation5 + $0xe08] sm:$0xff]
    %v558 = vld [vmem:[#allocation5 + $0xe10] sm:$0xff]
    %v559 = vld [vmem:[#allocation5 + $0xe18] sm:$0xff]
    %v560 = vld [vmem:[#allocation5 + $0xe20] sm:$0xff]
    %v561 = vld [vmem:[#allocation5 + $0xe28] sm:$0xff]
    %v562 = vld [vmem:[#allocation5 + $0xe30] sm:$0xff]
    %v563 = vld [vmem:[#allocation5 + $0xe38] sm:$0xff]
    %v564 = vld [vmem:[#allocation5 + $0xe40] sm:$0xff]
    %v565 = vld [vmem:[#allocation5 + $0xe48] sm:$0xff]
    %v566 = vld [vmem:[#allocation5 + $0xe50] sm:$0xff]
    %v567 = vld [vmem:[#allocation5 + $0xe58] sm:$0xff]
    %v568 = vld [vmem:[#allocation5 + $0xe60] sm:$0xff]
    %v569 = vld [vmem:[#allocation5 + $0xe68] sm:$0xff]
    %v570 = vld [vmem:[#allocation5 + $0xe70] sm:$0xff]
    %v571 = vld [vmem:[#allocation5 + $0xe78] sm:$0xff]
    %v572 = vld [vmem:[#allocation5 + $0xe80] sm:$0xff]
    %v573 = vld [vmem:[#allocation5 + $0xe88] sm:$0xff]
    %v574 = vld [vmem:[#allocation5 + $0xe90] sm:$0xff]
    %v575 = vld [vmem:[#allocation5 + $0xe98] sm:$0xff]
    %v576 = vld [vmem:[#allocation5 + $0xea0] sm:$0xff]
    %v577 = vld [vmem:[#allocation5 + $0xea8] sm:$0xff]
    %v578 = vld [vmem:[#allocation5 + $0xeb0] sm:$0xff]
    %v579 = vld [vmem:[#allocation5 + $0xeb8] sm:$0xff]
    %v580 = vld [vmem:[#allocation5 + $0xec0] sm:$0xff]
    %v581 = vld [vmem:[#allocation5 + $0xec8] sm:$0xff]
    %v582 = vld [vmem:[#allocation5 + $0xed0] sm:$0xff]
    %v583 = vld [vmem:[#allocation5 + $0xed8] sm:$0xff]
    %v584 = vld [vmem:[#allocation5 + $0xee0] sm:$0xff]
    %v585 = vld [vmem:[#allocation5 + $0xee8] sm:$0xff]
    %v586 = vld [vmem:[#allocation5 + $0xef0] sm:$0xff]
    %v587 = vld [vmem:[#allocation5 + $0xef8] sm:$0xff]
    %v588 = vld [vmem:[#allocation5 + $0xf00] sm:$0xff]
    %v589 = vld [vmem:[#allocation5 + $0xf08] sm:$0xff]
    %v590 = vld [vmem:[#allocation5 + $0xf10] sm:$0xff]
    %v591 = vld [vmem:[#allocation5 + $0xf18] sm:$0xff]
    %v592 = vld [vmem:[#allocation5 + $0xf20] sm:$0xff]
    %v593 = vld [vmem:[#allocation5 + $0xf28] sm:$0xff]
    %v594 = vld [vmem:[#allocation5 + $0xf30] sm:$0xff]
    %v595 = vld [vmem:[#allocation5 + $0xf38] sm:$0xff]
    %v596 = vld [vmem:[#allocation5 + $0xf40] sm:$0xff]
    %v597 = vld [vmem:[#allocation5 + $0xf48] sm:$0xff]
    %v598 = vld [vmem:[#allocation5 + $0xf50] sm:$0xff]
    %v599 = vld [vmem:[#allocation5 + $0xf58] sm:$0xff]
    %v600 = vld [vmem:[#allocation5 + $0xf60] sm:$0xff]
    %v601 = vld [vmem:[#allocation5 + $0xf68] sm:$0xff]
    %v602 = vld [vmem:[#allocation5 + $0xf70] sm:$0xff]
    %v603 = vld [vmem:[#allocation5 + $0xf78] sm:$0xff]
    %v604 = vld [vmem:[#allocation5 + $0xf80] sm:$0xff]
    %v605 = vld [vmem:[#allocation5 + $0xf88] sm:$0xff]
    %v606 = vld [vmem:[#allocation5 + $0xf90] sm:$0xff]
    %v607 = vld [vmem:[#allocation5 + $0xf98] sm:$0xff]
    %v608 = vld [vmem:[#allocation5 + $0xfa0] sm:$0xff]
    %v609 = vld [vmem:[#allocation5 + $0xfa8] sm:$0xff]
    %v610 = vld [vmem:[#allocation5 + $0xfb0] sm:$0xff]
    %v611 = vld [vmem:[#allocation5 + $0xfb8] sm:$0xff]
    %v612 = vld [vmem:[#allocation5 + $0xfc0] sm:$0xff]
    %v613 = vld [vmem:[#allocation5 + $0xfc8] sm:$0xff]
    %v614 = vld [vmem:[#allocation5 + $0xfd0] sm:$0xff]
    %v615 = vld [vmem:[#allocation5 + $0xfd8] sm:$0xff]
    %v616 = vld [vmem:[#allocation5 + $0xfe0] sm:$0xff]
    %v617 = vld [vmem:[#allocation5 + $0xfe8] sm:$0xff]
    %v618 = vld [vmem:[#allocation5 + $0xff0] sm:$0xff]
    %v619 = vld [vmem:[#allocation5 + $0xff8] sm:$0xff]
    %v620 = vld [vmem:[#allocation5 + $0x1000] sm:$0xff]
    %v621 = vld [vmem:[#allocation5 + $0x1008] sm:$0xff]
    %v622 = vld [vmem:[#allocation5 + $0x1010] sm:$0xff]
    %v623 = vld [vmem:[#allocation5 + $0x1018] sm:$0xff]
    %v624 = vld [vmem:[#allocation5 + $0x1020] sm:$0xff]
    %v625 = vld [vmem:[#allocation5 + $0x1028] sm:$0xff]
    %v626 = vld [vmem:[#allocation5 + $0x1030] sm:$0xff]
    %v627 = vld [vmem:[#allocation5 + $0x1038] sm:$0xff]
    %v628 = vld [vmem:[#allocation5 + $0x1040] sm:$0xff]
    %v629 = vld [vmem:[#allocation5 + $0x1048] sm:$0xff]
    %v630 = vld [vmem:[#allocation5 + $0x1050] sm:$0xff]
    %v631 = vld [vmem:[#allocation5 + $0x1058] sm:$0xff]
    %v632 = vld [vmem:[#allocation5 + $0x1060] sm:$0xff]
    %v633 = vld [vmem:[#allocation5 + $0x1068] sm:$0xff]
    %v634 = vld [vmem:[#allocation5 + $0x1070] sm:$0xff]
    %v635 = vld [vmem:[#allocation5 + $0x1078] sm:$0xff]
    %v636 = vld [vmem:[#allocation5 + $0x1080] sm:$0xff]
    %v637 = vld [vmem:[#allocation5 + $0x1088] sm:$0xff]
    %v638 = vld [vmem:[#allocation5 + $0x1090] sm:$0xff]
    %v639 = vld [vmem:[#allocation5 + $0x1098] sm:$0xff]
    %v640 = vld [vmem:[#allocation5 + $0x10a0] sm:$0xff]
    %v641 = vld [vmem:[#allocation5 + $0x10a8] sm:$0xff]
    %v642 = vld [vmem:[#allocation5 + $0x10b0] sm:$0xff]
    %v643 = vld [vmem:[#allocation5 + $0x10b8] sm:$0xff]
    %v644 = vld [vmem:[#allocation5 + $0x10c0] sm:$0xff]
    %v645 = vld [vmem:[#allocation5 + $0x10c8] sm:$0xff]
    %v646 = vld [vmem:[#allocation5 + $0x10d0] sm:$0xff]
    %v647 = vld [vmem:[#allocation5 + $0x10d8] sm:$0xff]
    %v648 = vld [vmem:[#allocation5 + $0x10e0] sm:$0xff]
    %v649 = vld [vmem:[#allocation5 + $0x10e8] sm:$0xff]
    %v650 = vld [vmem:[#allocation5 + $0x10f0] sm:$0xff]
    %v651 = vld [vmem:[#allocation5 + $0x10f8] sm:$0xff]
    %v652 = vld [vmem:[#allocation5 + $0x1100] sm:$0xff]
    %v653 = vld [vmem:[#allocation5 + $0x1108] sm:$0xff]
    %v654 = vld [vmem:[#allocation5 + $0x1110] sm:$0xff]
    %v655 = vld [vmem:[#allocation5 + $0x1118] sm:$0xff]
    %v656 = vld [vmem:[#allocation5 + $0x1120] sm:$0xff]
    %v657 = vld [vmem:[#allocation5 + $0x1128] sm:$0xff]
    %v658 = vld [vmem:[#allocation5 + $0x1130] sm:$0xff]
    %v659 = vld [vmem:[#allocation5 + $0x1138] sm:$0xff]
    %v660 = vld [vmem:[#allocation5 + $0x1140] sm:$0xff]
    %v661 = vld [vmem:[#allocation5 + $0x1148] sm:$0xff]
    %v662 = vld [vmem:[#allocation5 + $0x1150] sm:$0xff]
    %v663 = vld [vmem:[#allocation5 + $0x1158] sm:$0xff]
    %v664 = vld [vmem:[#allocation5 + $0x1160] sm:$0xff]
    %v665 = vld [vmem:[#allocation5 + $0x1168] sm:$0xff]
    %v666 = vld [vmem:[#allocation5 + $0x1170] sm:$0xff]
    %v667 = vld [vmem:[#allocation5 + $0x1178] sm:$0xff]
    %v668 = vld [vmem:[#allocation5 + $0x1180] sm:$0xff]
    %v669 = vld [vmem:[#allocation5 + $0x1188] sm:$0xff]
    %v670 = vld [vmem:[#allocation5 + $0x1190] sm:$0xff]
    %v671 = vld [vmem:[#allocation5 + $0x1198] sm:$0xff]
    %v672 = vld [vmem:[#allocation5 + $0x11a0] sm:$0xff]
    %v673 = vld [vmem:[#allocation5 + $0x11a8] sm:$0xff]
    %v674 = vld [vmem:[#allocation5 + $0x11b0] sm:$0xff]
    %v675 = vld [vmem:[#allocation5 + $0x11b8] sm:$0xff]
    %v676 = vld [vmem:[#allocation5 + $0x11c0] sm:$0xff]
    %v677 = vld [vmem:[#allocation5 + $0x11c8] sm:$0xff]
    %v678 = vld [vmem:[#allocation5 + $0x11d0] sm:$0xff]
    %v679 = vld [vmem:[#allocation5 + $0x11d8] sm:$0xff]
    %v680 = vld [vmem:[#allocation5 + $0x11e0] sm:$0xff]
    %v681 = vld [vmem:[#allocation5 + $0x11e8] sm:$0xff]
    %v682 = vld [vmem:[#allocation5 + $0x11f0] sm:$0xff]
    %v683 = vld [vmem:[#allocation5 + $0x11f8] sm:$0xff]
    %v684 = vld [vmem:[#allocation7] sm:$0x3f]
    %v686 = vperm.slane %v684, 0
    %v687 = vperm.slane %v684, 1
    %v688 = vperm.slane %v684, 2
    %v689 = vperm.slane %v684, 3
    %v690 = vperm.slane %v684, 4
    %v691 = vperm.slane %v684, 5
    %698 = vmatpush.msra.mxu0 %v198
    %699 = vmatpush.msra.mxu0 %v192
    %700 = vmatpush.msra.mxu0 %v186
    %701 = vmatpush.msra.mxu0 %v180
    %702 = vmatpush.msra.mxu0 %v174
    %703 = vmatpush.msra.mxu0 %v168
    %704 = vmatpush.msra.mxu0 %v162
    %705 = vmatpush.msra.mxu0 %v156
    %706 = vmatpush.msra.mxu0 %v150
    %707 = vmatpush.msra.mxu0 %v144
    %708 = vmatpush.msra.mxu0 %v138
    %709 = vmatpush.msra.mxu0 %v132
    %710 = vmatpush.msra.mxu0 %v126
    %711 = vmatpush.msra.mxu0 %v120
    %712 = vmatpush.msra.mxu0 %v114
    %713 = vmatpush.msra.mxu0 %v108
    %714 = vmatmul.f32.gmra.mxu0 %v60
    %v715 = vpop.f32.mrf.mxu0
    %v716 = vadd.f32 %v686, %v715
    %717 = vmatmul.f32.gmra.mxu0 %v66
    %v718 = vpop.f32.mrf.mxu0
    %v719 = vadd.f32 %v686, %v718
    %720 = vmatmul.f32.gmra.mxu0 %v72
    %v721 = vpop.f32.mrf.mxu0
    %v722 = vadd.f32 %v686, %v721
    %723 = vmatmul.f32.gmra.mxu0 %v78
    %v724 = vpop.f32.mrf.mxu0
    %v725 = vadd.f32 %v686, %v724
    %726 = vmatmul.f32.gmra.mxu0 %v84
    %v727 = vpop.f32.mrf.mxu0
    %v728 = vadd.f32 %v686, %v727
    %729 = vmatmul.f32.gmra.mxu0 %v90
    %v730 = vpop.f32.mrf.mxu0
    %v731 = vadd.f32 %v686, %v730
    %732 = vmatmul.f32.gmra.mxu0 %v96
    %v733 = vpop.f32.mrf.mxu0
    %v734 = vadd.f32 %v686, %v733
    %735 = vmatmul.f32.gmra.mxu0 %v102
    %v736 = vpop.f32.mrf.mxu0
    %v737 = vadd.f32 %v686, %v736
    %738 = vdwg.mxu0
    %739 = vmatpush.msra.mxu0 %v294
    %740 = vmatpush.msra.mxu0 %v288
    %741 = vmatpush.msra.mxu0 %v282
    %742 = vmatpush.msra.mxu0 %v276
    %743 = vmatpush.msra.mxu0 %v270
    %744 = vmatpush.msra.mxu0 %v264
    %745 = vmatpush.msra.mxu0 %v258
    %746 = vmatpush.msra.mxu0 %v252
    %747 = vmatpush.msra.mxu0 %v246
    %748 = vmatpush.msra.mxu0 %v240
    %749 = vmatpush.msra.mxu0 %v234
    %750 = vmatpush.msra.mxu0 %v228
    %751 = vmatpush.msra.mxu0 %v222
    %752 = vmatpush.msra.mxu0 %v216
    %753 = vmatpush.msra.mxu0 %v210
    %754 = vmatpush.msra.mxu0 %v204
    %755 = vmatmul.f32.gmra.mxu0 %v61
    %v756 = vpop.f32.mrf.mxu0
    %v757 = vadd.f32 %v716, %v756
    %758 = vmatmul.f32.gmra.mxu0 %v67
    %v759 = vpop.f32.mrf.mxu0
    %v760 = vadd.f32 %v719, %v759
    %761 = vmatmul.f32.gmra.mxu0 %v73
    %v762 = vpop.f32.mrf.mxu0
    %v763 = vadd.f32 %v722, %v762
    %764 = vmatmul.f32.gmra.mxu0 %v79
    %v765 = vpop.f32.mrf.mxu0
    %v766 = vadd.f32 %v725, %v765
    %767 = vmatmul.f32.gmra.mxu0 %v85
    %v768 = vpop.f32.mrf.mxu0
    %v769 = vadd.f32 %v728, %v768
    %770 = vmatmul.f32.gmra.mxu0 %v91
    %v771 = vpop.f32.mrf.mxu0
    %v772 = vadd.f32 %v731, %v771
    %773 = vmatmul.f32.gmra.mxu0 %v97
    %v774 = vpop.f32.mrf.mxu0
    %v775 = vadd.f32 %v734, %v774
    %776 = vmatmul.f32.gmra.mxu0 %v103
    %v777 = vpop.f32.mrf.mxu0
    %v778 = vadd.f32 %v737, %v777
    %779 = vdwg.mxu0
    %780 = vmatpush.msra.mxu0 %v390
    %781 = vmatpush.msra.mxu0 %v384
    %782 = vmatpush.msra.mxu0 %v378
    %783 = vmatpush.msra.mxu0 %v372
    %784 = vmatpush.msra.mxu0 %v366
    %785 = vmatpush.msra.mxu0 %v360
    %786 = vmatpush.msra.mxu0 %v354
    %787 = vmatpush.msra.mxu0 %v348
    %788 = vmatpush.msra.mxu0 %v342
    %789 = vmatpush.msra.mxu0 %v336
    %790 = vmatpush.msra.mxu0 %v330
    %791 = vmatpush.msra.mxu0 %v324
    %792 = vmatpush.msra.mxu0 %v318
    %793 = vmatpush.msra.mxu0 %v312
    %794 = vmatpush.msra.mxu0 %v306
    %795 = vmatpush.msra.mxu0 %v300
    %796 = vmatmul.f32.gmra.mxu0 %v62
    %v797 = vpop.f32.mrf.mxu0
    %v798 = vadd.f32 %v757, %v797
    %799 = vmatmul.f32.gmra.mxu0 %v68
    %v800 = vpop.f32.mrf.mxu0
    %v801 = vadd.f32 %v760, %v800
    %802 = vmatmul.f32.gmra.mxu0 %v74
    %v803 = vpop.f32.mrf.mxu0
    %v804 = vadd.f32 %v763, %v803
    %805 = vmatmul.f32.gmra.mxu0 %v80
    %v806 = vpop.f32.mrf.mxu0
    %v807 = vadd.f32 %v766, %v806
    %808 = vmatmul.f32.gmra.mxu0 %v86
    %v809 = vpop.f32.mrf.mxu0
    %v810 = vadd.f32 %v769, %v809
    %811 = vmatmul.f32.gmra.mxu0 %v92
    %v812 = vpop.f32.mrf.mxu0
    %v813 = vadd.f32 %v772, %v812
    %814 = vmatmul.f32.gmra.mxu0 %v98
    %v815 = vpop.f32.mrf.mxu0
    %v816 = vadd.f32 %v775, %v815
    %817 = vmatmul.f32.gmra.mxu0 %v104
    %v818 = vpop.f32.mrf.mxu0
    %v819 = vadd.f32 %v778, %v818
    %820 = vdwg.mxu0
    %821 = vmatpush.msra.mxu0 %v486
    %822 = vmatpush.msra.mxu0 %v480
    %823 = vmatpush.msra.mxu0 %v474
    %824 = vmatpush.msra.mxu0 %v468
    %825 = vmatpush.msra.mxu0 %v462
    %826 = vmatpush.msra.mxu0 %v456
    %827 = vmatpush.msra.mxu0 %v450
    %828 = vmatpush.msra.mxu0 %v444
    %829 = vmatpush.msra.mxu0 %v438
    %830 = vmatpush.msra.mxu0 %v432
    %831 = vmatpush.msra.mxu0 %v426
    %832 = vmatpush.msra.mxu0 %v420
    %833 = vmatpush.msra.mxu0 %v414
    %834 = vmatpush.msra.mxu0 %v408
    %835 = vmatpush.msra.mxu0 %v402
    %836 = vmatpush.msra.mxu0 %v396
    %837 = vmatmul.f32.gmra.mxu0 %v63
    %v838 = vpop.f32.mrf.mxu0
    %v839 = vadd.f32 %v798, %v838
    %840 = vmatmul.f32.gmra.mxu0 %v69
    %v841 = vpop.f32.mrf.mxu0
    %v842 = vadd.f32 %v801, %v841
    %843 = vmatmul.f32.gmra.mxu0 %v75
    %v844 = vpop.f32.mrf.mxu0
    %v845 = vadd.f32 %v804, %v844
    %846 = vmatmul.f32.gmra.mxu0 %v81
    %v847 = vpop.f32.mrf.mxu0
    %v848 = vadd.f32 %v807, %v847
    %849 = vmatmul.f32.gmra.mxu0 %v87
    %v850 = vpop.f32.mrf.mxu0
    %v851 = vadd.f32 %v810, %v850
    %852 = vmatmul.f32.gmra.mxu0 %v93
    %v853 = vpop.f32.mrf.mxu0
    %v854 = vadd.f32 %v813, %v853
    %855 = vmatmul.f32.gmra.mxu0 %v99
    %v856 = vpop.f32.mrf.mxu0
    %v857 = vadd.f32 %v816, %v856
    %858 = vmatmul.f32.gmra.mxu0 %v105
    %v859 = vpop.f32.mrf.mxu0
    %v860 = vadd.f32 %v819, %v859
    %861 = vdwg.mxu0
    %862 = vmatpush.msra.mxu0 %v582
    %863 = vmatpush.msra.mxu0 %v576
    %864 = vmatpush.msra.mxu0 %v570
    %865 = vmatpush.msra.mxu0 %v564
    %866 = vmatpush.msra.mxu0 %v558
    %867 = vmatpush.msra.mxu0 %v552
    %868 = vmatpush.msra.mxu0 %v546
    %869 = vmatpush.msra.mxu0 %v540
    %870 = vmatpush.msra.mxu0 %v534
    %871 = vmatpush.msra.mxu0 %v528
    %872 = vmatpush.msra.mxu0 %v522
    %873 = vmatpush.msra.mxu0 %v516
    %874 = vmatpush.msra.mxu0 %v510
    %875 = vmatpush.msra.mxu0 %v504
    %876 = vmatpush.msra.mxu0 %v498
    %877 = vmatpush.msra.mxu0 %v492
    %878 = vmatmul.f32.gmra.mxu0 %v64
    %v879 = vpop.f32.mrf.mxu0
    %v880 = vadd.f32 %v839, %v879
    %881 = vmatmul.f32.gmra.mxu0 %v70
    %v882 = vpop.f32.mrf.mxu0
    %v883 = vadd.f32 %v842, %v882
    %884 = vmatmul.f32.gmra.mxu0 %v76
    %v885 = vpop.f32.mrf.mxu0
    %v886 = vadd.f32 %v845, %v885
    %887 = vmatmul.f32.gmra.mxu0 %v82
    %v888 = vpop.f32.mrf.mxu0
    %v889 = vadd.f32 %v848, %v888
    %890 = vmatmul.f32.gmra.mxu0 %v88
    %v891 = vpop.f32.mrf.mxu0
    %v892 = vadd.f32 %v851, %v891
    %893 = vmatmul.f32.gmra.mxu0 %v94
    %v894 = vpop.f32.mrf.mxu0
    %v895 = vadd.f32 %v854, %v894
    %896 = vmatmul.f32.gmra.mxu0 %v100
    %v897 = vpop.f32.mrf.mxu0
    %v898 = vadd.f32 %v857, %v897
    %899 = vmatmul.f32.gmra.mxu0 %v106
    %v900 = vpop.f32.mrf.mxu0
    %v901 = vadd.f32 %v860, %v900
    %902 = vdwg.mxu0
    %903 = vmatpush.msra.mxu0 %v678
    %904 = vmatpush.msra.mxu0 %v672
    %905 = vmatpush.msra.mxu0 %v666
    %906 = vmatpush.msra.mxu0 %v660
    %907 = vmatpush.msra.mxu0 %v654
    %908 = vmatpush.msra.mxu0 %v648
    %909 = vmatpush.msra.mxu0 %v642
    %910 = vmatpush.msra.mxu0 %v636
    %911 = vmatpush.msra.mxu0 %v630
    %912 = vmatpush.msra.mxu0 %v624
    %913 = vmatpush.msra.mxu0 %v618
    %914 = vmatpush.msra.mxu0 %v612
    %915 = vmatpush.msra.mxu0 %v606
    %916 = vmatpush.msra.mxu0 %v600
    %917 = vmatpush.msra.mxu0 %v594
    %918 = vmatpush.msra.mxu0 %v588
    %919 = vmatmul.f32.gmra.mxu0 %v65
    %v920 = vpop.f32.mrf.mxu0
    %v921 = vadd.f32 %v880, %v920
    %922 = vmatmul.f32.gmra.mxu0 %v71
    %v923 = vpop.f32.mrf.mxu0
    %v924 = vadd.f32 %v883, %v923
    %925 = vmatmul.f32.gmra.mxu0 %v77
    %v926 = vpop.f32.mrf.mxu0
    %v927 = vadd.f32 %v886, %v926
    %928 = vmatmul.f32.gmra.mxu0 %v83
    %v929 = vpop.f32.mrf.mxu0
    %v930 = vadd.f32 %v889, %v929
    %931 = vmatmul.f32.gmra.mxu0 %v89
    %v932 = vpop.f32.mrf.mxu0
    %v933 = vadd.f32 %v892, %v932
    %934 = vmatmul.f32.gmra.mxu0 %v95
    %v935 = vpop.f32.mrf.mxu0
    %v936 = vadd.f32 %v895, %v935
    %937 = vmatmul.f32.gmra.mxu0 %v101
    %v938 = vpop.f32.mrf.mxu0
    %v939 = vadd.f32 %v898, %v938
    %940 = vmatmul.f32.gmra.mxu0 %v107
    %v941 = vpop.f32.mrf.mxu0
    %v942 = vadd.f32 %v901, %v941
    %943 = vdwg.mxu0
    %944 = vmatpush.msra.mxu0 %v199
    %945 = vmatpush.msra.mxu0 %v193
    %946 = vmatpush.msra.mxu0 %v187
    %947 = vmatpush.msra.mxu0 %v181
    %948 = vmatpush.msra.mxu0 %v175
    %949 = vmatpush.msra.mxu0 %v169
    %950 = vmatpush.msra.mxu0 %v163
    %951 = vmatpush.msra.mxu0 %v157
    %952 = vmatpush.msra.mxu0 %v151
    %953 = vmatpush.msra.mxu0 %v145
    %954 = vmatpush.msra.mxu0 %v139
    %955 = vmatpush.msra.mxu0 %v133
    %956 = vmatpush.msra.mxu0 %v127
    %957 = vmatpush.msra.mxu0 %v121
    %958 = vmatpush.msra.mxu0 %v115
    %959 = vmatpush.msra.mxu0 %v109
    %960 = vmatmul.f32.gmra.mxu0 %v60
    %v961 = vpop.f32.mrf.mxu0
    %v962 = vadd.f32 %v687, %v961
    %963 = vmatmul.f32.gmra.mxu0 %v66
    %v964 = vpop.f32.mrf.mxu0
    %v965 = vadd.f32 %v687, %v964
    %966 = vmatmul.f32.gmra.mxu0 %v72
    %v967 = vpop.f32.mrf.mxu0
    %v968 = vadd.f32 %v687, %v967
    %969 = vmatmul.f32.gmra.mxu0 %v78
    %v970 = vpop.f32.mrf.mxu0
    %v971 = vadd.f32 %v687, %v970
    %972 = vmatmul.f32.gmra.mxu0 %v84
    %v973 = vpop.f32.mrf.mxu0
    %v974 = vadd.f32 %v687, %v973
    %975 = vmatmul.f32.gmra.mxu0 %v90
    %v976 = vpop.f32.mrf.mxu0
    %v977 = vadd.f32 %v687, %v976
    %978 = vmatmul.f32.gmra.mxu0 %v96
    %v979 = vpop.f32.mrf.mxu0
    %v980 = vadd.f32 %v687, %v979
    %981 = vmatmul.f32.gmra.mxu0 %v102
    %v982 = vpop.f32.mrf.mxu0
    %v983 = vadd.f32 %v687, %v982
    %984 = vdwg.mxu0
    %985 = vmatpush.msra.mxu0 %v295
    %986 = vmatpush.msra.mxu0 %v289
    %987 = vmatpush.msra.mxu0 %v283
    %988 = vmatpush.msra.mxu0 %v277
    %989 = vmatpush.msra.mxu0 %v271
    %990 = vmatpush.msra.mxu0 %v265
    %991 = vmatpush.msra.mxu0 %v259
    %992 = vmatpush.msra.mxu0 %v253
    %993 = vmatpush.msra.mxu0 %v247
    %994 = vmatpush.msra.mxu0 %v241
    %995 = vmatpush.msra.mxu0 %v235
    %996 = vmatpush.msra.mxu0 %v229
    %997 = vmatpush.msra.mxu0 %v223
    %998 = vmatpush.msra.mxu0 %v217
    %999 = vmatpush.msra.mxu0 %v211
    %1000 = vmatpush.msra.mxu0 %v205
    %1001 = vmatmul.f32.gmra.mxu0 %v61
    %v1002 = vpop.f32.mrf.mxu0
    %v1003 = vadd.f32 %v962, %v1002
    %1004 = vmatmul.f32.gmra.mxu0 %v67
    %v1005 = vpop.f32.mrf.mxu0
    %v1006 = vadd.f32 %v965, %v1005
    %1007 = vmatmul.f32.gmra.mxu0 %v73
    %v1008 = vpop.f32.mrf.mxu0
    %v1009 = vadd.f32 %v968, %v1008
    %1010 = vmatmul.f32.gmra.mxu0 %v79
    %v1011 = vpop.f32.mrf.mxu0
    %v1012 = vadd.f32 %v971, %v1011
    %1013 = vmatmul.f32.gmra.mxu0 %v85
    %v1014 = vpop.f32.mrf.mxu0
    %v1015 = vadd.f32 %v974, %v1014
    %1016 = vmatmul.f32.gmra.mxu0 %v91
    %v1017 = vpop.f32.mrf.mxu0
    %v1018 = vadd.f32 %v977, %v1017
    %1019 = vmatmul.f32.gmra.mxu0 %v97
    %v1020 = vpop.f32.mrf.mxu0
    %v1021 = vadd.f32 %v980, %v1020
    %1022 = vmatmul.f32.gmra.mxu0 %v103
    %v1023 = vpop.f32.mrf.mxu0
    %v1024 = vadd.f32 %v983, %v1023
    %1025 = vdwg.mxu0
    %1026 = vmatpush.msra.mxu0 %v391
    %1027 = vmatpush.msra.mxu0 %v385
    %1028 = vmatpush.msra.mxu0 %v379
    %1029 = vmatpush.msra.mxu0 %v373
    %1030 = vmatpush.msra.mxu0 %v367
    %1031 = vmatpush.msra.mxu0 %v361
    %1032 = vmatpush.msra.mxu0 %v355
    %1033 = vmatpush.msra.mxu0 %v349
    %1034 = vmatpush.msra.mxu0 %v343
    %1035 = vmatpush.msra.mxu0 %v337
    %1036 = vmatpush.msra.mxu0 %v331
    %1037 = vmatpush.msra.mxu0 %v325
    %1038 = vmatpush.msra.mxu0 %v319
    %1039 = vmatpush.msra.mxu0 %v313
    %1040 = vmatpush.msra.mxu0 %v307
    %1041 = vmatpush.msra.mxu0 %v301
    %1042 = vmatmul.f32.gmra.mxu0 %v62
    %v1043 = vpop.f32.mrf.mxu0
    %v1044 = vadd.f32 %v1003, %v1043
    %1045 = vmatmul.f32.gmra.mxu0 %v68
    %v1046 = vpop.f32.mrf.mxu0
    %v1047 = vadd.f32 %v1006, %v1046
    %1048 = vmatmul.f32.gmra.mxu0 %v74
    %v1049 = vpop.f32.mrf.mxu0
    %v1050 = vadd.f32 %v1009, %v1049
    %1051 = vmatmul.f32.gmra.mxu0 %v80
    %v1052 = vpop.f32.mrf.mxu0
    %v1053 = vadd.f32 %v1012, %v1052
    %1054 = vmatmul.f32.gmra.mxu0 %v86
    %v1055 = vpop.f32.mrf.mxu0
    %v1056 = vadd.f32 %v1015, %v1055
    %1057 = vmatmul.f32.gmra.mxu0 %v92
    %v1058 = vpop.f32.mrf.mxu0
    %v1059 = vadd.f32 %v1018, %v1058
    %1060 = vmatmul.f32.gmra.mxu0 %v98
    %v1061 = vpop.f32.mrf.mxu0
    %v1062 = vadd.f32 %v1021, %v1061
    %1063 = vmatmul.f32.gmra.mxu0 %v104
    %v1064 = vpop.f32.mrf.mxu0
    %v1065 = vadd.f32 %v1024, %v1064
    %1066 = vdwg.mxu0
    %1067 = vmatpush.msra.mxu0 %v487
    %1068 = vmatpush.msra.mxu0 %v481
    %1069 = vmatpush.msra.mxu0 %v475
    %1070 = vmatpush.msra.mxu0 %v469
    %1071 = vmatpush.msra.mxu0 %v463
    %1072 = vmatpush.msra.mxu0 %v457
    %1073 = vmatpush.msra.mxu0 %v451
    %1074 = vmatpush.msra.mxu0 %v445
    %1075 = vmatpush.msra.mxu0 %v439
    %1076 = vmatpush.msra.mxu0 %v433
    %1077 = vmatpush.msra.mxu0 %v427
    %1078 = vmatpush.msra.mxu0 %v421
    %1079 = vmatpush.msra.mxu0 %v415
    %1080 = vmatpush.msra.mxu0 %v409
    %1081 = vmatpush.msra.mxu0 %v403
    %1082 = vmatpush.msra.mxu0 %v397
    %1083 = vmatmul.f32.gmra.mxu0 %v63
    %v1084 = vpop.f32.mrf.mxu0
    %v1085 = vadd.f32 %v1044, %v1084
    %1086 = vmatmul.f32.gmra.mxu0 %v69
    %v1087 = vpop.f32.mrf.mxu0
    %v1088 = vadd.f32 %v1047, %v1087
    %1089 = vmatmul.f32.gmra.mxu0 %v75
    %v1090 = vpop.f32.mrf.mxu0
    %v1091 = vadd.f32 %v1050, %v1090
    %1092 = vmatmul.f32.gmra.mxu0 %v81
    %v1093 = vpop.f32.mrf.mxu0
    %v1094 = vadd.f32 %v1053, %v1093
    %1095 = vmatmul.f32.gmra.mxu0 %v87
    %v1096 = vpop.f32.mrf.mxu0
    %v1097 = vadd.f32 %v1056, %v1096
    %1098 = vmatmul.f32.gmra.mxu0 %v93
    %v1099 = vpop.f32.mrf.mxu0
    %v1100 = vadd.f32 %v1059, %v1099
    %1101 = vmatmul.f32.gmra.mxu0 %v99
    %v1102 = vpop.f32.mrf.mxu0
    %v1103 = vadd.f32 %v1062, %v1102
    %1104 = vmatmul.f32.gmra.mxu0 %v105
    %v1105 = vpop.f32.mrf.mxu0
    %v1106 = vadd.f32 %v1065, %v1105
    %1107 = vdwg.mxu0
    %1108 = vmatpush.msra.mxu0 %v583
    %1109 = vmatpush.msra.mxu0 %v577
    %1110 = vmatpush.msra.mxu0 %v571
    %1111 = vmatpush.msra.mxu0 %v565
    %1112 = vmatpush.msra.mxu0 %v559
    %1113 = vmatpush.msra.mxu0 %v553
    %1114 = vmatpush.msra.mxu0 %v547
    %1115 = vmatpush.msra.mxu0 %v541
    %1116 = vmatpush.msra.mxu0 %v535
    %1117 = vmatpush.msra.mxu0 %v529
    %1118 = vmatpush.msra.mxu0 %v523
    %1119 = vmatpush.msra.mxu0 %v517
    %1120 = vmatpush.msra.mxu0 %v511
    %1121 = vmatpush.msra.mxu0 %v505
    %1122 = vmatpush.msra.mxu0 %v499
    %1123 = vmatpush.msra.mxu0 %v493
    %1124 = vmatmul.f32.gmra.mxu0 %v64
    %v1125 = vpop.f32.mrf.mxu0
    %v1126 = vadd.f32 %v1085, %v1125
    %1127 = vmatmul.f32.gmra.mxu0 %v70
    %v1128 = vpop.f32.mrf.mxu0
    %v1129 = vadd.f32 %v1088, %v1128
    %1130 = vmatmul.f32.gmra.mxu0 %v76
    %v1131 = vpop.f32.mrf.mxu0
    %v1132 = vadd.f32 %v1091, %v1131
    %1133 = vmatmul.f32.gmra.mxu0 %v82
    %v1134 = vpop.f32.mrf.mxu0
    %v1135 = vadd.f32 %v1094, %v1134
    %1136 = vmatmul.f32.gmra.mxu0 %v88
    %v1137 = vpop.f32.mrf.mxu0
    %v1138 = vadd.f32 %v1097, %v1137
    %1139 = vmatmul.f32.gmra.mxu0 %v94
    %v1140 = vpop.f32.mrf.mxu0
    %v1141 = vadd.f32 %v1100, %v1140
    %1142 = vmatmul.f32.gmra.mxu0 %v100
    %v1143 = vpop.f32.mrf.mxu0
    %v1144 = vadd.f32 %v1103, %v1143
    %1145 = vmatmul.f32.gmra.mxu0 %v106
    %v1146 = vpop.f32.mrf.mxu0
    %v1147 = vadd.f32 %v1106, %v1146
    %1148 = vdwg.mxu0
    %1149 = vmatpush.msra.mxu0 %v679
    %1150 = vmatpush.msra.mxu0 %v673
    %1151 = vmatpush.msra.mxu0 %v667
    %1152 = vmatpush.msra.mxu0 %v661
    %1153 = vmatpush.msra.mxu0 %v655
    %1154 = vmatpush.msra.mxu0 %v649
    %1155 = vmatpush.msra.mxu0 %v643
    %1156 = vmatpush.msra.mxu0 %v637
    %1157 = vmatpush.msra.mxu0 %v631
    %1158 = vmatpush.msra.mxu0 %v625
    %1159 = vmatpush.msra.mxu0 %v619
    %1160 = vmatpush.msra.mxu0 %v613
    %1161 = vmatpush.msra.mxu0 %v607
    %1162 = vmatpush.msra.mxu0 %v601
    %1163 = vmatpush.msra.mxu0 %v595
    %1164 = vmatpush.msra.mxu0 %v589
    %1165 = vmatmul.f32.gmra.mxu0 %v65
    %v1166 = vpop.f32.mrf.mxu0
    %v1167 = vadd.f32 %v1126, %v1166
    %1168 = vmatmul.f32.gmra.mxu0 %v71
    %v1169 = vpop.f32.mrf.mxu0
    %v1170 = vadd.f32 %v1129, %v1169
    %1171 = vmatmul.f32.gmra.mxu0 %v77
    %v1172 = vpop.f32.mrf.mxu0
    %v1173 = vadd.f32 %v1132, %v1172
    %1174 = vmatmul.f32.gmra.mxu0 %v83
    %v1175 = vpop.f32.mrf.mxu0
    %v1176 = vadd.f32 %v1135, %v1175
    %1177 = vmatmul.f32.gmra.mxu0 %v89
    %v1178 = vpop.f32.mrf.mxu0
    %v1179 = vadd.f32 %v1138, %v1178
    %1180 = vmatmul.f32.gmra.mxu0 %v95
    %v1181 = vpop.f32.mrf.mxu0
    %v1182 = vadd.f32 %v1141, %v1181
    %1183 = vmatmul.f32.gmra.mxu0 %v101
    %v1184 = vpop.f32.mrf.mxu0
    %v1185 = vadd.f32 %v1144, %v1184
    %1186 = vmatmul.f32.gmra.mxu0 %v107
    %v1187 = vpop.f32.mrf.mxu0
    %v1188 = vadd.f32 %v1147, %v1187
    %1189 = vdwg.mxu0
    %1190 = vmatpush.msra.mxu0 %v200
    %1191 = vmatpush.msra.mxu0 %v194
    %1192 = vmatpush.msra.mxu0 %v188
    %1193 = vmatpush.msra.mxu0 %v182
    %1194 = vmatpush.msra.mxu0 %v176
    %1195 = vmatpush.msra.mxu0 %v170
    %1196 = vmatpush.msra.mxu0 %v164
    %1197 = vmatpush.msra.mxu0 %v158
    %1198 = vmatpush.msra.mxu0 %v152
    %1199 = vmatpush.msra.mxu0 %v146
    %1200 = vmatpush.msra.mxu0 %v140
    %1201 = vmatpush.msra.mxu0 %v134
    %1202 = vmatpush.msra.mxu0 %v128
    %1203 = vmatpush.msra.mxu0 %v122
    %1204 = vmatpush.msra.mxu0 %v116
    %1205 = vmatpush.msra.mxu0 %v110
    %1206 = vmatmul.f32.gmra.mxu0 %v60
    %v1207 = vpop.f32.mrf.mxu0
    %v1208 = vadd.f32 %v688, %v1207
    %1209 = vmatmul.f32.gmra.mxu0 %v66
    %v1210 = vpop.f32.mrf.mxu0
    %v1211 = vadd.f32 %v688, %v1210
    %1212 = vmatmul.f32.gmra.mxu0 %v72
    %v1213 = vpop.f32.mrf.mxu0
    %v1214 = vadd.f32 %v688, %v1213
    %1215 = vmatmul.f32.gmra.mxu0 %v78
    %v1216 = vpop.f32.mrf.mxu0
    %v1217 = vadd.f32 %v688, %v1216
    %1218 = vmatmul.f32.gmra.mxu0 %v84
    %v1219 = vpop.f32.mrf.mxu0
    %v1220 = vadd.f32 %v688, %v1219
    %1221 = vmatmul.f32.gmra.mxu0 %v90
    %v1222 = vpop.f32.mrf.mxu0
    %v1223 = vadd.f32 %v688, %v1222
    %1224 = vmatmul.f32.gmra.mxu0 %v96
    %v1225 = vpop.f32.mrf.mxu0
    %v1226 = vadd.f32 %v688, %v1225
    %1227 = vmatmul.f32.gmra.mxu0 %v102
    %v1228 = vpop.f32.mrf.mxu0
    %v1229 = vadd.f32 %v688, %v1228
    %1230 = vdwg.mxu0
    %1231 = vmatpush.msra.mxu0 %v296
    %1232 = vmatpush.msra.mxu0 %v290
    %1233 = vmatpush.msra.mxu0 %v284
    %1234 = vmatpush.msra.mxu0 %v278
    %1235 = vmatpush.msra.mxu0 %v272
    %1236 = vmatpush.msra.mxu0 %v266
    %1237 = vmatpush.msra.mxu0 %v260
    %1238 = vmatpush.msra.mxu0 %v254
    %1239 = vmatpush.msra.mxu0 %v248
    %1240 = vmatpush.msra.mxu0 %v242
    %1241 = vmatpush.msra.mxu0 %v236
    %1242 = vmatpush.msra.mxu0 %v230
    %1243 = vmatpush.msra.mxu0 %v224
    %1244 = vmatpush.msra.mxu0 %v218
    %1245 = vmatpush.msra.mxu0 %v212
    %1246 = vmatpush.msra.mxu0 %v206
    %1247 = vmatmul.f32.gmra.mxu0 %v61
    %v1248 = vpop.f32.mrf.mxu0
    %v1249 = vadd.f32 %v1208, %v1248
    %1250 = vmatmul.f32.gmra.mxu0 %v67
    %v1251 = vpop.f32.mrf.mxu0
    %v1252 = vadd.f32 %v1211, %v1251
    %1253 = vmatmul.f32.gmra.mxu0 %v73
    %v1254 = vpop.f32.mrf.mxu0
    %v1255 = vadd.f32 %v1214, %v1254
    %1256 = vmatmul.f32.gmra.mxu0 %v79
    %v1257 = vpop.f32.mrf.mxu0
    %v1258 = vadd.f32 %v1217, %v1257
    %1259 = vmatmul.f32.gmra.mxu0 %v85
    %v1260 = vpop.f32.mrf.mxu0
    %v1261 = vadd.f32 %v1220, %v1260
    %1262 = vmatmul.f32.gmra.mxu0 %v91
    %v1263 = vpop.f32.mrf.mxu0
    %v1264 = vadd.f32 %v1223, %v1263
    %1265 = vmatmul.f32.gmra.mxu0 %v97
    %v1266 = vpop.f32.mrf.mxu0
    %v1267 = vadd.f32 %v1226, %v1266
    %1268 = vmatmul.f32.gmra.mxu0 %v103
    %v1269 = vpop.f32.mrf.mxu0
    %v1270 = vadd.f32 %v1229, %v1269
    %1271 = vdwg.mxu0
    %1272 = vmatpush.msra.mxu0 %v392
    %1273 = vmatpush.msra.mxu0 %v386
    %1274 = vmatpush.msra.mxu0 %v380
    %1275 = vmatpush.msra.mxu0 %v374
    %1276 = vmatpush.msra.mxu0 %v368
    %1277 = vmatpush.msra.mxu0 %v362
    %1278 = vmatpush.msra.mxu0 %v356
    %1279 = vmatpush.msra.mxu0 %v350
    %1280 = vmatpush.msra.mxu0 %v344
    %1281 = vmatpush.msra.mxu0 %v338
    %1282 = vmatpush.msra.mxu0 %v332
    %1283 = vmatpush.msra.mxu0 %v326
    %1284 = vmatpush.msra.mxu0 %v320
    %1285 = vmatpush.msra.mxu0 %v314
    %1286 = vmatpush.msra.mxu0 %v308
    %1287 = vmatpush.msra.mxu0 %v302
    %1288 = vmatmul.f32.gmra.mxu0 %v62
    %v1289 = vpop.f32.mrf.mxu0
    %v1290 = vadd.f32 %v1249, %v1289
    %1291 = vmatmul.f32.gmra.mxu0 %v68
    %v1292 = vpop.f32.mrf.mxu0
    %v1293 = vadd.f32 %v1252, %v1292
    %1294 = vmatmul.f32.gmra.mxu0 %v74
    %v1295 = vpop.f32.mrf.mxu0
    %v1296 = vadd.f32 %v1255, %v1295
    %1297 = vmatmul.f32.gmra.mxu0 %v80
    %v1298 = vpop.f32.mrf.mxu0
    %v1299 = vadd.f32 %v1258, %v1298
    %1300 = vmatmul.f32.gmra.mxu0 %v86
    %v1301 = vpop.f32.mrf.mxu0
    %v1302 = vadd.f32 %v1261, %v1301
    %1303 = vmatmul.f32.gmra.mxu0 %v92
    %v1304 = vpop.f32.mrf.mxu0
    %v1305 = vadd.f32 %v1264, %v1304
    %1306 = vmatmul.f32.gmra.mxu0 %v98
    %v1307 = vpop.f32.mrf.mxu0
    %v1308 = vadd.f32 %v1267, %v1307
    %1309 = vmatmul.f32.gmra.mxu0 %v104
    %v1310 = vpop.f32.mrf.mxu0
    %v1311 = vadd.f32 %v1270, %v1310
    %1312 = vdwg.mxu0
    %1313 = vmatpush.msra.mxu0 %v488
    %1314 = vmatpush.msra.mxu0 %v482
    %1315 = vmatpush.msra.mxu0 %v476
    %1316 = vmatpush.msra.mxu0 %v470
    %1317 = vmatpush.msra.mxu0 %v464
    %1318 = vmatpush.msra.mxu0 %v458
    %1319 = vmatpush.msra.mxu0 %v452
    %1320 = vmatpush.msra.mxu0 %v446
    %1321 = vmatpush.msra.mxu0 %v440
    %1322 = vmatpush.msra.mxu0 %v434
    %1323 = vmatpush.msra.mxu0 %v428
    %1324 = vmatpush.msra.mxu0 %v422
    %1325 = vmatpush.msra.mxu0 %v416
    %1326 = vmatpush.msra.mxu0 %v410
    %1327 = vmatpush.msra.mxu0 %v404
    %1328 = vmatpush.msra.mxu0 %v398
    %1329 = vmatmul.f32.gmra.mxu0 %v63
    %v1330 = vpop.f32.mrf.mxu0
    %v1331 = vadd.f32 %v1290, %v1330
    %1332 = vmatmul.f32.gmra.mxu0 %v69
    %v1333 = vpop.f32.mrf.mxu0
    %v1334 = vadd.f32 %v1293, %v1333
    %1335 = vmatmul.f32.gmra.mxu0 %v75
    %v1336 = vpop.f32.mrf.mxu0
    %v1337 = vadd.f32 %v1296, %v1336
    %1338 = vmatmul.f32.gmra.mxu0 %v81
    %v1339 = vpop.f32.mrf.mxu0
    %v1340 = vadd.f32 %v1299, %v1339
    %1341 = vmatmul.f32.gmra.mxu0 %v87
    %v1342 = vpop.f32.mrf.mxu0
    %v1343 = vadd.f32 %v1302, %v1342
    %1344 = vmatmul.f32.gmra.mxu0 %v93
    %v1345 = vpop.f32.mrf.mxu0
    %v1346 = vadd.f32 %v1305, %v1345
    %1347 = vmatmul.f32.gmra.mxu0 %v99
    %v1348 = vpop.f32.mrf.mxu0
    %v1349 = vadd.f32 %v1308, %v1348
    %1350 = vmatmul.f32.gmra.mxu0 %v105
    %v1351 = vpop.f32.mrf.mxu0
    %v1352 = vadd.f32 %v1311, %v1351
    %1353 = vdwg.mxu0
    %1354 = vmatpush.msra.mxu0 %v584
    %1355 = vmatpush.msra.mxu0 %v578
    %1356 = vmatpush.msra.mxu0 %v572
    %1357 = vmatpush.msra.mxu0 %v566
    %1358 = vmatpush.msra.mxu0 %v560
    %1359 = vmatpush.msra.mxu0 %v554
    %1360 = vmatpush.msra.mxu0 %v548
    %1361 = vmatpush.msra.mxu0 %v542
    %1362 = vmatpush.msra.mxu0 %v536
    %1363 = vmatpush.msra.mxu0 %v530
    %1364 = vmatpush.msra.mxu0 %v524
    %1365 = vmatpush.msra.mxu0 %v518
    %1366 = vmatpush.msra.mxu0 %v512
    %1367 = vmatpush.msra.mxu0 %v506
    %1368 = vmatpush.msra.mxu0 %v500
    %1369 = vmatpush.msra.mxu0 %v494
    %1370 = vmatmul.f32.gmra.mxu0 %v64
    %v1371 = vpop.f32.mrf.mxu0
    %v1372 = vadd.f32 %v1331, %v1371
    %1373 = vmatmul.f32.gmra.mxu0 %v70
    %v1374 = vpop.f32.mrf.mxu0
    %v1375 = vadd.f32 %v1334, %v1374
    %1376 = vmatmul.f32.gmra.mxu0 %v76
    %v1377 = vpop.f32.mrf.mxu0
    %v1378 = vadd.f32 %v1337, %v1377
    %1379 = vmatmul.f32.gmra.mxu0 %v82
    %v1380 = vpop.f32.mrf.mxu0
    %v1381 = vadd.f32 %v1340, %v1380
    %1382 = vmatmul.f32.gmra.mxu0 %v88
    %v1383 = vpop.f32.mrf.mxu0
    %v1384 = vadd.f32 %v1343, %v1383
    %1385 = vmatmul.f32.gmra.mxu0 %v94
    %v1386 = vpop.f32.mrf.mxu0
    %v1387 = vadd.f32 %v1346, %v1386
    %1388 = vmatmul.f32.gmra.mxu0 %v100
    %v1389 = vpop.f32.mrf.mxu0
    %v1390 = vadd.f32 %v1349, %v1389
    %1391 = vmatmul.f32.gmra.mxu0 %v106
    %v1392 = vpop.f32.mrf.mxu0
    %v1393 = vadd.f32 %v1352, %v1392
    %1394 = vdwg.mxu0
    %1395 = vmatpush.msra.mxu0 %v680
    %1396 = vmatpush.msra.mxu0 %v674
    %1397 = vmatpush.msra.mxu0 %v668
    %1398 = vmatpush.msra.mxu0 %v662
    %1399 = vmatpush.msra.mxu0 %v656
    %1400 = vmatpush.msra.mxu0 %v650
    %1401 = vmatpush.msra.mxu0 %v644
    %1402 = vmatpush.msra.mxu0 %v638
    %1403 = vmatpush.msra.mxu0 %v632
    %1404 = vmatpush.msra.mxu0 %v626
    %1405 = vmatpush.msra.mxu0 %v620
    %1406 = vmatpush.msra.mxu0 %v614
    %1407 = vmatpush.msra.mxu0 %v608
    %1408 = vmatpush.msra.mxu0 %v602
    %1409 = vmatpush.msra.mxu0 %v596
    %1410 = vmatpush.msra.mxu0 %v590
    %1411 = vmatmul.f32.gmra.mxu0 %v65
    %v1412 = vpop.f32.mrf.mxu0
    %v1413 = vadd.f32 %v1372, %v1412
    %1414 = vmatmul.f32.gmra.mxu0 %v71
    %v1415 = vpop.f32.mrf.mxu0
    %v1416 = vadd.f32 %v1375, %v1415
    %1417 = vmatmul.f32.gmra.mxu0 %v77
    %v1418 = vpop.f32.mrf.mxu0
    %v1419 = vadd.f32 %v1378, %v1418
    %1420 = vmatmul.f32.gmra.mxu0 %v83
    %v1421 = vpop.f32.mrf.mxu0
    %v1422 = vadd.f32 %v1381, %v1421
    %1423 = vmatmul.f32.gmra.mxu0 %v89
    %v1424 = vpop.f32.mrf.mxu0
    %v1425 = vadd.f32 %v1384, %v1424
    %1426 = vmatmul.f32.gmra.mxu0 %v95
    %v1427 = vpop.f32.mrf.mxu0
    %v1428 = vadd.f32 %v1387, %v1427
    %1429 = vmatmul.f32.gmra.mxu0 %v101
    %v1430 = vpop.f32.mrf.mxu0
    %v1431 = vadd.f32 %v1390, %v1430
    %1432 = vmatmul.f32.gmra.mxu0 %v107
    %v1433 = vpop.f32.mrf.mxu0
    %v1434 = vadd.f32 %v1393, %v1433
    %1435 = vdwg.mxu0
    %1436 = vmatpush.msra.mxu0 %v201
    %1437 = vmatpush.msra.mxu0 %v195
    %1438 = vmatpush.msra.mxu0 %v189
    %1439 = vmatpush.msra.mxu0 %v183
    %1440 = vmatpush.msra.mxu0 %v177
    %1441 = vmatpush.msra.mxu0 %v171
    %1442 = vmatpush.msra.mxu0 %v165
    %1443 = vmatpush.msra.mxu0 %v159
    %1444 = vmatpush.msra.mxu0 %v153
    %1445 = vmatpush.msra.mxu0 %v147
    %1446 = vmatpush.msra.mxu0 %v141
    %1447 = vmatpush.msra.mxu0 %v135
    %1448 = vmatpush.msra.mxu0 %v129
    %1449 = vmatpush.msra.mxu0 %v123
    %1450 = vmatpush.msra.mxu0 %v117
    %1451 = vmatpush.msra.mxu0 %v111
    %1452 = vmatmul.f32.gmra.mxu0 %v60
    %v1453 = vpop.f32.mrf.mxu0
    %v1454 = vadd.f32 %v689, %v1453
    %1455 = vmatmul.f32.gmra.mxu0 %v66
    %v1456 = vpop.f32.mrf.mxu0
    %v1457 = vadd.f32 %v689, %v1456
    %1458 = vmatmul.f32.gmra.mxu0 %v72
    %v1459 = vpop.f32.mrf.mxu0
    %v1460 = vadd.f32 %v689, %v1459
    %1461 = vmatmul.f32.gmra.mxu0 %v78
    %v1462 = vpop.f32.mrf.mxu0
    %v1463 = vadd.f32 %v689, %v1462
    %1464 = vmatmul.f32.gmra.mxu0 %v84
    %v1465 = vpop.f32.mrf.mxu0
    %v1466 = vadd.f32 %v689, %v1465
    %1467 = vmatmul.f32.gmra.mxu0 %v90
    %v1468 = vpop.f32.mrf.mxu0
    %v1469 = vadd.f32 %v689, %v1468
    %1470 = vmatmul.f32.gmra.mxu0 %v96
    %v1471 = vpop.f32.mrf.mxu0
    %v1472 = vadd.f32 %v689, %v1471
    %1473 = vmatmul.f32.gmra.mxu0 %v102
    %v1474 = vpop.f32.mrf.mxu0
    %v1475 = vadd.f32 %v689, %v1474
    %1476 = vdwg.mxu0
    %1477 = vmatpush.msra.mxu0 %v297
    %1478 = vmatpush.msra.mxu0 %v291
    %1479 = vmatpush.msra.mxu0 %v285
    %1480 = vmatpush.msra.mxu0 %v279
    %1481 = vmatpush.msra.mxu0 %v273
    %1482 = vmatpush.msra.mxu0 %v267
    %1483 = vmatpush.msra.mxu0 %v261
    %1484 = vmatpush.msra.mxu0 %v255
    %1485 = vmatpush.msra.mxu0 %v249
    %1486 = vmatpush.msra.mxu0 %v243
    %1487 = vmatpush.msra.mxu0 %v237
    %1488 = vmatpush.msra.mxu0 %v231
    %1489 = vmatpush.msra.mxu0 %v225
    %1490 = vmatpush.msra.mxu0 %v219
    %1491 = vmatpush.msra.mxu0 %v213
    %1492 = vmatpush.msra.mxu0 %v207
    %1493 = vmatmul.f32.gmra.mxu0 %v61
    %v1494 = vpop.f32.mrf.mxu0
    %v1495 = vadd.f32 %v1454, %v1494
    %1496 = vmatmul.f32.gmra.mxu0 %v67
    %v1497 = vpop.f32.mrf.mxu0
    %v1498 = vadd.f32 %v1457, %v1497
    %1499 = vmatmul.f32.gmra.mxu0 %v73
    %v1500 = vpop.f32.mrf.mxu0
    %v1501 = vadd.f32 %v1460, %v1500
    %1502 = vmatmul.f32.gmra.mxu0 %v79
    %v1503 = vpop.f32.mrf.mxu0
    %v1504 = vadd.f32 %v1463, %v1503
    %1505 = vmatmul.f32.gmra.mxu0 %v85
    %v1506 = vpop.f32.mrf.mxu0
    %v1507 = vadd.f32 %v1466, %v1506
    %1508 = vmatmul.f32.gmra.mxu0 %v91
    %v1509 = vpop.f32.mrf.mxu0
    %v1510 = vadd.f32 %v1469, %v1509
    %1511 = vmatmul.f32.gmra.mxu0 %v97
    %v1512 = vpop.f32.mrf.mxu0
    %v1513 = vadd.f32 %v1472, %v1512
    %1514 = vmatmul.f32.gmra.mxu0 %v103
    %v1515 = vpop.f32.mrf.mxu0
    %v1516 = vadd.f32 %v1475, %v1515
    %1517 = vdwg.mxu0
    %1518 = vmatpush.msra.mxu0 %v393
    %1519 = vmatpush.msra.mxu0 %v387
    %1520 = vmatpush.msra.mxu0 %v381
    %1521 = vmatpush.msra.mxu0 %v375
    %1522 = vmatpush.msra.mxu0 %v369
    %1523 = vmatpush.msra.mxu0 %v363
    %1524 = vmatpush.msra.mxu0 %v357
    %1525 = vmatpush.msra.mxu0 %v351
    %1526 = vmatpush.msra.mxu0 %v345
    %1527 = vmatpush.msra.mxu0 %v339
    %1528 = vmatpush.msra.mxu0 %v333
    %1529 = vmatpush.msra.mxu0 %v327
    %1530 = vmatpush.msra.mxu0 %v321
    %1531 = vmatpush.msra.mxu0 %v315
    %1532 = vmatpush.msra.mxu0 %v309
    %1533 = vmatpush.msra.mxu0 %v303
    %1534 = vmatmul.f32.gmra.mxu0 %v62
    %v1535 = vpop.f32.mrf.mxu0
    %v1536 = vadd.f32 %v1495, %v1535
    %1537 = vmatmul.f32.gmra.mxu0 %v68
    %v1538 = vpop.f32.mrf.mxu0
    %v1539 = vadd.f32 %v1498, %v1538
    %1540 = vmatmul.f32.gmra.mxu0 %v74
    %v1541 = vpop.f32.mrf.mxu0
    %v1542 = vadd.f32 %v1501, %v1541
    %1543 = vmatmul.f32.gmra.mxu0 %v80
    %v1544 = vpop.f32.mrf.mxu0
    %v1545 = vadd.f32 %v1504, %v1544
    %1546 = vmatmul.f32.gmra.mxu0 %v86
    %v1547 = vpop.f32.mrf.mxu0
    %v1548 = vadd.f32 %v1507, %v1547
    %1549 = vmatmul.f32.gmra.mxu0 %v92
    %v1550 = vpop.f32.mrf.mxu0
    %v1551 = vadd.f32 %v1510, %v1550
    %1552 = vmatmul.f32.gmra.mxu0 %v98
    %v1553 = vpop.f32.mrf.mxu0
    %v1554 = vadd.f32 %v1513, %v1553
    %1555 = vmatmul.f32.gmra.mxu0 %v104
    %v1556 = vpop.f32.mrf.mxu0
    %v1557 = vadd.f32 %v1516, %v1556
    %1558 = vdwg.mxu0
    %1559 = vmatpush.msra.mxu0 %v489
    %1560 = vmatpush.msra.mxu0 %v483
    %1561 = vmatpush.msra.mxu0 %v477
    %1562 = vmatpush.msra.mxu0 %v471
    %1563 = vmatpush.msra.mxu0 %v465
    %1564 = vmatpush.msra.mxu0 %v459
    %1565 = vmatpush.msra.mxu0 %v453
    %1566 = vmatpush.msra.mxu0 %v447
    %1567 = vmatpush.msra.mxu0 %v441
    %1568 = vmatpush.msra.mxu0 %v435
    %1569 = vmatpush.msra.mxu0 %v429
    %1570 = vmatpush.msra.mxu0 %v423
    %1571 = vmatpush.msra.mxu0 %v417
    %1572 = vmatpush.msra.mxu0 %v411
    %1573 = vmatpush.msra.mxu0 %v405
    %1574 = vmatpush.msra.mxu0 %v399
    %1575 = vmatmul.f32.gmra.mxu0 %v63
    %v1576 = vpop.f32.mrf.mxu0
    %v1577 = vadd.f32 %v1536, %v1576
    %1578 = vmatmul.f32.gmra.mxu0 %v69
    %v1579 = vpop.f32.mrf.mxu0
    %v1580 = vadd.f32 %v1539, %v1579
    %1581 = vmatmul.f32.gmra.mxu0 %v75
    %v1582 = vpop.f32.mrf.mxu0
    %v1583 = vadd.f32 %v1542, %v1582
    %1584 = vmatmul.f32.gmra.mxu0 %v81
    %v1585 = vpop.f32.mrf.mxu0
    %v1586 = vadd.f32 %v1545, %v1585
    %1587 = vmatmul.f32.gmra.mxu0 %v87
    %v1588 = vpop.f32.mrf.mxu0
    %v1589 = vadd.f32 %v1548, %v1588
    %1590 = vmatmul.f32.gmra.mxu0 %v93
    %v1591 = vpop.f32.mrf.mxu0
    %v1592 = vadd.f32 %v1551, %v1591
    %1593 = vmatmul.f32.gmra.mxu0 %v99
    %v1594 = vpop.f32.mrf.mxu0
    %v1595 = vadd.f32 %v1554, %v1594
    %1596 = vmatmul.f32.gmra.mxu0 %v105
    %v1597 = vpop.f32.mrf.mxu0
    %v1598 = vadd.f32 %v1557, %v1597
    %1599 = vdwg.mxu0
    %1600 = vmatpush.msra.mxu0 %v585
    %1601 = vmatpush.msra.mxu0 %v579
    %1602 = vmatpush.msra.mxu0 %v573
    %1603 = vmatpush.msra.mxu0 %v567
    %1604 = vmatpush.msra.mxu0 %v561
    %1605 = vmatpush.msra.mxu0 %v555
    %1606 = vmatpush.msra.mxu0 %v549
    %1607 = vmatpush.msra.mxu0 %v543
    %1608 = vmatpush.msra.mxu0 %v537
    %1609 = vmatpush.msra.mxu0 %v531
    %1610 = vmatpush.msra.mxu0 %v525
    %1611 = vmatpush.msra.mxu0 %v519
    %1612 = vmatpush.msra.mxu0 %v513
    %1613 = vmatpush.msra.mxu0 %v507
    %1614 = vmatpush.msra.mxu0 %v501
    %1615 = vmatpush.msra.mxu0 %v495
    %1616 = vmatmul.f32.gmra.mxu0 %v64
    %v1617 = vpop.f32.mrf.mxu0
    %v1618 = vadd.f32 %v1577, %v1617
    %1619 = vmatmul.f32.gmra.mxu0 %v70
    %v1620 = vpop.f32.mrf.mxu0
    %v1621 = vadd.f32 %v1580, %v1620
    %1622 = vmatmul.f32.gmra.mxu0 %v76
    %v1623 = vpop.f32.mrf.mxu0
    %v1624 = vadd.f32 %v1583, %v1623
    %1625 = vmatmul.f32.gmra.mxu0 %v82
    %v1626 = vpop.f32.mrf.mxu0
    %v1627 = vadd.f32 %v1586, %v1626
    %1628 = vmatmul.f32.gmra.mxu0 %v88
    %v1629 = vpop.f32.mrf.mxu0
    %v1630 = vadd.f32 %v1589, %v1629
    %1631 = vmatmul.f32.gmra.mxu0 %v94
    %v1632 = vpop.f32.mrf.mxu0
    %v1633 = vadd.f32 %v1592, %v1632
    %1634 = vmatmul.f32.gmra.mxu0 %v100
    %v1635 = vpop.f32.mrf.mxu0
    %v1636 = vadd.f32 %v1595, %v1635
    %1637 = vmatmul.f32.gmra.mxu0 %v106
    %v1638 = vpop.f32.mrf.mxu0
    %v1639 = vadd.f32 %v1598, %v1638
    %1640 = vdwg.mxu0
    %1641 = vmatpush.msra.mxu0 %v681
    %1642 = vmatpush.msra.mxu0 %v675
    %1643 = vmatpush.msra.mxu0 %v669
    %1644 = vmatpush.msra.mxu0 %v663
    %1645 = vmatpush.msra.mxu0 %v657
    %1646 = vmatpush.msra.mxu0 %v651
    %1647 = vmatpush.msra.mxu0 %v645
    %1648 = vmatpush.msra.mxu0 %v639
    %1649 = vmatpush.msra.mxu0 %v633
    %1650 = vmatpush.msra.mxu0 %v627
    %1651 = vmatpush.msra.mxu0 %v621
    %1652 = vmatpush.msra.mxu0 %v615
    %1653 = vmatpush.msra.mxu0 %v609
    %1654 = vmatpush.msra.mxu0 %v603
    %1655 = vmatpush.msra.mxu0 %v597
    %1656 = vmatpush.msra.mxu0 %v591
    %1657 = vmatmul.f32.gmra.mxu0 %v65
    %v1658 = vpop.f32.mrf.mxu0
    %v1659 = vadd.f32 %v1618, %v1658
    %1660 = vmatmul.f32.gmra.mxu0 %v71
    %v1661 = vpop.f32.mrf.mxu0
    %v1662 = vadd.f32 %v1621, %v1661
    %1663 = vmatmul.f32.gmra.mxu0 %v77
    %v1664 = vpop.f32.mrf.mxu0
    %v1665 = vadd.f32 %v1624, %v1664
    %1666 = vmatmul.f32.gmra.mxu0 %v83
    %v1667 = vpop.f32.mrf.mxu0
    %v1668 = vadd.f32 %v1627, %v1667
    %1669 = vmatmul.f32.gmra.mxu0 %v89
    %v1670 = vpop.f32.mrf.mxu0
    %v1671 = vadd.f32 %v1630, %v1670
    %1672 = vmatmul.f32.gmra.mxu0 %v95
    %v1673 = vpop.f32.mrf.mxu0
    %v1674 = vadd.f32 %v1633, %v1673
    %1675 = vmatmul.f32.gmra.mxu0 %v101
    %v1676 = vpop.f32.mrf.mxu0
    %v1677 = vadd.f32 %v1636, %v1676
    %1678 = vmatmul.f32.gmra.mxu0 %v107
    %v1679 = vpop.f32.mrf.mxu0
    %v1680 = vadd.f32 %v1639, %v1679
    %1681 = vdwg.mxu0
    %1682 = vmatpush.msra.mxu0 %v202
    %1683 = vmatpush.msra.mxu0 %v196
    %1684 = vmatpush.msra.mxu0 %v190
    %1685 = vmatpush.msra.mxu0 %v184
    %1686 = vmatpush.msra.mxu0 %v178
    %1687 = vmatpush.msra.mxu0 %v172
    %1688 = vmatpush.msra.mxu0 %v166
    %1689 = vmatpush.msra.mxu0 %v160
    %1690 = vmatpush.msra.mxu0 %v154
    %1691 = vmatpush.msra.mxu0 %v148
    %1692 = vmatpush.msra.mxu0 %v142
    %1693 = vmatpush.msra.mxu0 %v136
    %1694 = vmatpush.msra.mxu0 %v130
    %1695 = vmatpush.msra.mxu0 %v124
    %1696 = vmatpush.msra.mxu0 %v118
    %1697 = vmatpush.msra.mxu0 %v112
    %1698 = vmatmul.f32.gmra.mxu0 %v60
    %v1699 = vpop.f32.mrf.mxu0
    %v1700 = vadd.f32 %v690, %v1699
    %1701 = vmatmul.f32.gmra.mxu0 %v66
    %v1702 = vpop.f32.mrf.mxu0
    %v1703 = vadd.f32 %v690, %v1702
    %1704 = vmatmul.f32.gmra.mxu0 %v72
    %v1705 = vpop.f32.mrf.mxu0
    %v1706 = vadd.f32 %v690, %v1705
    %1707 = vmatmul.f32.gmra.mxu0 %v78
    %v1708 = vpop.f32.mrf.mxu0
    %v1709 = vadd.f32 %v690, %v1708
    %1710 = vmatmul.f32.gmra.mxu0 %v84
    %v1711 = vpop.f32.mrf.mxu0
    %v1712 = vadd.f32 %v690, %v1711
    %1713 = vmatmul.f32.gmra.mxu0 %v90
    %v1714 = vpop.f32.mrf.mxu0
    %v1715 = vadd.f32 %v690, %v1714
    %1716 = vmatmul.f32.gmra.mxu0 %v96
    %v1717 = vpop.f32.mrf.mxu0
    %v1718 = vadd.f32 %v690, %v1717
    %1719 = vmatmul.f32.gmra.mxu0 %v102
    %v1720 = vpop.f32.mrf.mxu0
    %v1721 = vadd.f32 %v690, %v1720
    %1722 = vdwg.mxu0
    %1723 = vmatpush.msra.mxu0 %v298
    %1724 = vmatpush.msra.mxu0 %v292
    %1725 = vmatpush.msra.mxu0 %v286
    %1726 = vmatpush.msra.mxu0 %v280
    %1727 = vmatpush.msra.mxu0 %v274
    %1728 = vmatpush.msra.mxu0 %v268
    %1729 = vmatpush.msra.mxu0 %v262
    %1730 = vmatpush.msra.mxu0 %v256
    %1731 = vmatpush.msra.mxu0 %v250
    %1732 = vmatpush.msra.mxu0 %v244
    %1733 = vmatpush.msra.mxu0 %v238
    %1734 = vmatpush.msra.mxu0 %v232
    %1735 = vmatpush.msra.mxu0 %v226
    %1736 = vmatpush.msra.mxu0 %v220
    %1737 = vmatpush.msra.mxu0 %v214
    %1738 = vmatpush.msra.mxu0 %v208
    %1739 = vmatmul.f32.gmra.mxu0 %v61
    %v1740 = vpop.f32.mrf.mxu0
    %v1741 = vadd.f32 %v1700, %v1740
    %1742 = vmatmul.f32.gmra.mxu0 %v67
    %v1743 = vpop.f32.mrf.mxu0
    %v1744 = vadd.f32 %v1703, %v1743
    %1745 = vmatmul.f32.gmra.mxu0 %v73
    %v1746 = vpop.f32.mrf.mxu0
    %v1747 = vadd.f32 %v1706, %v1746
    %1748 = vmatmul.f32.gmra.mxu0 %v79
    %v1749 = vpop.f32.mrf.mxu0
    %v1750 = vadd.f32 %v1709, %v1749
    %1751 = vmatmul.f32.gmra.mxu0 %v85
    %v1752 = vpop.f32.mrf.mxu0
    %v1753 = vadd.f32 %v1712, %v1752
    %1754 = vmatmul.f32.gmra.mxu0 %v91
    %v1755 = vpop.f32.mrf.mxu0
    %v1756 = vadd.f32 %v1715, %v1755
    %1757 = vmatmul.f32.gmra.mxu0 %v97
    %v1758 = vpop.f32.mrf.mxu0
    %v1759 = vadd.f32 %v1718, %v1758
    %1760 = vmatmul.f32.gmra.mxu0 %v103
    %v1761 = vpop.f32.mrf.mxu0
    %v1762 = vadd.f32 %v1721, %v1761
    %1763 = vdwg.mxu0
    %1764 = vmatpush.msra.mxu0 %v394
    %1765 = vmatpush.msra.mxu0 %v388
    %1766 = vmatpush.msra.mxu0 %v382
    %1767 = vmatpush.msra.mxu0 %v376
    %1768 = vmatpush.msra.mxu0 %v370
    %1769 = vmatpush.msra.mxu0 %v364
    %1770 = vmatpush.msra.mxu0 %v358
    %1771 = vmatpush.msra.mxu0 %v352
    %1772 = vmatpush.msra.mxu0 %v346
    %1773 = vmatpush.msra.mxu0 %v340
    %1774 = vmatpush.msra.mxu0 %v334
    %1775 = vmatpush.msra.mxu0 %v328
    %1776 = vmatpush.msra.mxu0 %v322
    %1777 = vmatpush.msra.mxu0 %v316
    %1778 = vmatpush.msra.mxu0 %v310
    %1779 = vmatpush.msra.mxu0 %v304
    %1780 = vmatmul.f32.gmra.mxu0 %v62
    %v1781 = vpop.f32.mrf.mxu0
    %v1782 = vadd.f32 %v1741, %v1781
    %1783 = vmatmul.f32.gmra.mxu0 %v68
    %v1784 = vpop.f32.mrf.mxu0
    %v1785 = vadd.f32 %v1744, %v1784
    %1786 = vmatmul.f32.gmra.mxu0 %v74
    %v1787 = vpop.f32.mrf.mxu0
    %v1788 = vadd.f32 %v1747, %v1787
    %1789 = vmatmul.f32.gmra.mxu0 %v80
    %v1790 = vpop.f32.mrf.mxu0
    %v1791 = vadd.f32 %v1750, %v1790
    %1792 = vmatmul.f32.gmra.mxu0 %v86
    %v1793 = vpop.f32.mrf.mxu0
    %v1794 = vadd.f32 %v1753, %v1793
    %1795 = vmatmul.f32.gmra.mxu0 %v92
    %v1796 = vpop.f32.mrf.mxu0
    %v1797 = vadd.f32 %v1756, %v1796
    %1798 = vmatmul.f32.gmra.mxu0 %v98
    %v1799 = vpop.f32.mrf.mxu0
    %v1800 = vadd.f32 %v1759, %v1799
    %1801 = vmatmul.f32.gmra.mxu0 %v104
    %v1802 = vpop.f32.mrf.mxu0
    %v1803 = vadd.f32 %v1762, %v1802
    %1804 = vdwg.mxu0
    %1805 = vmatpush.msra.mxu0 %v490
    %1806 = vmatpush.msra.mxu0 %v484
    %1807 = vmatpush.msra.mxu0 %v478
    %1808 = vmatpush.msra.mxu0 %v472
    %1809 = vmatpush.msra.mxu0 %v466
    %1810 = vmatpush.msra.mxu0 %v460
    %1811 = vmatpush.msra.mxu0 %v454
    %1812 = vmatpush.msra.mxu0 %v448
    %1813 = vmatpush.msra.mxu0 %v442
    %1814 = vmatpush.msra.mxu0 %v436
    %1815 = vmatpush.msra.mxu0 %v430
    %1816 = vmatpush.msra.mxu0 %v424
    %1817 = vmatpush.msra.mxu0 %v418
    %1818 = vmatpush.msra.mxu0 %v412
    %1819 = vmatpush.msra.mxu0 %v406
    %1820 = vmatpush.msra.mxu0 %v400
    %1821 = vmatmul.f32.gmra.mxu0 %v63
    %v1822 = vpop.f32.mrf.mxu0
    %v1823 = vadd.f32 %v1782, %v1822
    %1824 = vmatmul.f32.gmra.mxu0 %v69
    %v1825 = vpop.f32.mrf.mxu0
    %v1826 = vadd.f32 %v1785, %v1825
    %1827 = vmatmul.f32.gmra.mxu0 %v75
    %v1828 = vpop.f32.mrf.mxu0
    %v1829 = vadd.f32 %v1788, %v1828
    %1830 = vmatmul.f32.gmra.mxu0 %v81
    %v1831 = vpop.f32.mrf.mxu0
    %v1832 = vadd.f32 %v1791, %v1831
    %1833 = vmatmul.f32.gmra.mxu0 %v87
    %v1834 = vpop.f32.mrf.mxu0
    %v1835 = vadd.f32 %v1794, %v1834
    %1836 = vmatmul.f32.gmra.mxu0 %v93
    %v1837 = vpop.f32.mrf.mxu0
    %v1838 = vadd.f32 %v1797, %v1837
    %1839 = vmatmul.f32.gmra.mxu0 %v99
    %v1840 = vpop.f32.mrf.mxu0
    %v1841 = vadd.f32 %v1800, %v1840
    %1842 = vmatmul.f32.gmra.mxu0 %v105
    %v1843 = vpop.f32.mrf.mxu0
    %v1844 = vadd.f32 %v1803, %v1843
    %1845 = vdwg.mxu0
    %1846 = vmatpush.msra.mxu0 %v586
    %1847 = vmatpush.msra.mxu0 %v580
    %1848 = vmatpush.msra.mxu0 %v574
    %1849 = vmatpush.msra.mxu0 %v568
    %1850 = vmatpush.msra.mxu0 %v562
    %1851 = vmatpush.msra.mxu0 %v556
    %1852 = vmatpush.msra.mxu0 %v550
    %1853 = vmatpush.msra.mxu0 %v544
    %1854 = vmatpush.msra.mxu0 %v538
    %1855 = vmatpush.msra.mxu0 %v532
    %1856 = vmatpush.msra.mxu0 %v526
    %1857 = vmatpush.msra.mxu0 %v520
    %1858 = vmatpush.msra.mxu0 %v514
    %1859 = vmatpush.msra.mxu0 %v508
    %1860 = vmatpush.msra.mxu0 %v502
    %1861 = vmatpush.msra.mxu0 %v496
    %1862 = vmatmul.f32.gmra.mxu0 %v64
    %v1863 = vpop.f32.mrf.mxu0
    %v1864 = vadd.f32 %v1823, %v1863
    %1865 = vmatmul.f32.gmra.mxu0 %v70
    %v1866 = vpop.f32.mrf.mxu0
    %v1867 = vadd.f32 %v1826, %v1866
    %1868 = vmatmul.f32.gmra.mxu0 %v76
    %v1869 = vpop.f32.mrf.mxu0
    %v1870 = vadd.f32 %v1829, %v1869
    %1871 = vmatmul.f32.gmra.mxu0 %v82
    %v1872 = vpop.f32.mrf.mxu0
    %v1873 = vadd.f32 %v1832, %v1872
    %1874 = vmatmul.f32.gmra.mxu0 %v88
    %v1875 = vpop.f32.mrf.mxu0
    %v1876 = vadd.f32 %v1835, %v1875
    %1877 = vmatmul.f32.gmra.mxu0 %v94
    %v1878 = vpop.f32.mrf.mxu0
    %v1879 = vadd.f32 %v1838, %v1878
    %1880 = vmatmul.f32.gmra.mxu0 %v100
    %v1881 = vpop.f32.mrf.mxu0
    %v1882 = vadd.f32 %v1841, %v1881
    %1883 = vmatmul.f32.gmra.mxu0 %v106
    %v1884 = vpop.f32.mrf.mxu0
    %v1885 = vadd.f32 %v1844, %v1884
    %1886 = vdwg.mxu0
    %1887 = vmatpush.msra.mxu0 %v682
    %1888 = vmatpush.msra.mxu0 %v676
    %1889 = vmatpush.msra.mxu0 %v670
    %1890 = vmatpush.msra.mxu0 %v664
    %1891 = vmatpush.msra.mxu0 %v658
    %1892 = vmatpush.msra.mxu0 %v652
    %1893 = vmatpush.msra.mxu0 %v646
    %1894 = vmatpush.msra.mxu0 %v640
    %1895 = vmatpush.msra.mxu0 %v634
    %1896 = vmatpush.msra.mxu0 %v628
    %1897 = vmatpush.msra.mxu0 %v622
    %1898 = vmatpush.msra.mxu0 %v616
    %1899 = vmatpush.msra.mxu0 %v610
    %1900 = vmatpush.msra.mxu0 %v604
    %1901 = vmatpush.msra.mxu0 %v598
    %1902 = vmatpush.msra.mxu0 %v592
    %1903 = vmatmul.f32.gmra.mxu0 %v65
    %v1904 = vpop.f32.mrf.mxu0
    %v1905 = vadd.f32 %v1864, %v1904
    %1906 = vmatmul.f32.gmra.mxu0 %v71
    %v1907 = vpop.f32.mrf.mxu0
    %v1908 = vadd.f32 %v1867, %v1907
    %1909 = vmatmul.f32.gmra.mxu0 %v77
    %v1910 = vpop.f32.mrf.mxu0
    %v1911 = vadd.f32 %v1870, %v1910
    %1912 = vmatmul.f32.gmra.mxu0 %v83
    %v1913 = vpop.f32.mrf.mxu0
    %v1914 = vadd.f32 %v1873, %v1913
    %1915 = vmatmul.f32.gmra.mxu0 %v89
    %v1916 = vpop.f32.mrf.mxu0
    %v1917 = vadd.f32 %v1876, %v1916
    %1918 = vmatmul.f32.gmra.mxu0 %v95
    %v1919 = vpop.f32.mrf.mxu0
    %v1920 = vadd.f32 %v1879, %v1919
    %1921 = vmatmul.f32.gmra.mxu0 %v101
    %v1922 = vpop.f32.mrf.mxu0
    %v1923 = vadd.f32 %v1882, %v1922
    %1924 = vmatmul.f32.gmra.mxu0 %v107
    %v1925 = vpop.f32.mrf.mxu0
    %v1926 = vadd.f32 %v1885, %v1925
    %1927 = vdwg.mxu0
    %1928 = vmatpush.msra.mxu0 %v203
    %1929 = vmatpush.msra.mxu0 %v197
    %1930 = vmatpush.msra.mxu0 %v191
    %1931 = vmatpush.msra.mxu0 %v185
    %1932 = vmatpush.msra.mxu0 %v179
    %1933 = vmatpush.msra.mxu0 %v173
    %1934 = vmatpush.msra.mxu0 %v167
    %1935 = vmatpush.msra.mxu0 %v161
    %1936 = vmatpush.msra.mxu0 %v155
    %1937 = vmatpush.msra.mxu0 %v149
    %1938 = vmatpush.msra.mxu0 %v143
    %1939 = vmatpush.msra.mxu0 %v137
    %1940 = vmatpush.msra.mxu0 %v131
    %1941 = vmatpush.msra.mxu0 %v125
    %1942 = vmatpush.msra.mxu0 %v119
    %1943 = vmatpush.msra.mxu0 %v113
    %1944 = vmatmul.f32.gmra.mxu0 %v60
    %v1945 = vpop.f32.mrf.mxu0
    %v1946 = vadd.f32 %v691, %v1945
    %1947 = vmatmul.f32.gmra.mxu0 %v66
    %v1948 = vpop.f32.mrf.mxu0
    %v1949 = vadd.f32 %v691, %v1948
    %1950 = vmatmul.f32.gmra.mxu0 %v72
    %v1951 = vpop.f32.mrf.mxu0
    %v1952 = vadd.f32 %v691, %v1951
    %1953 = vmatmul.f32.gmra.mxu0 %v78
    %v1954 = vpop.f32.mrf.mxu0
    %v1955 = vadd.f32 %v691, %v1954
    %1956 = vmatmul.f32.gmra.mxu0 %v84
    %v1957 = vpop.f32.mrf.mxu0
    %v1958 = vadd.f32 %v691, %v1957
    %1959 = vmatmul.f32.gmra.mxu0 %v90
    %v1960 = vpop.f32.mrf.mxu0
    %v1961 = vadd.f32 %v691, %v1960
    %1962 = vmatmul.f32.gmra.mxu0 %v96
    %v1963 = vpop.f32.mrf.mxu0
    %v1964 = vadd.f32 %v691, %v1963
    %1965 = vmatmul.f32.gmra.mxu0 %v102
    %v1966 = vpop.f32.mrf.mxu0
    %v1967 = vadd.f32 %v691, %v1966
    %1968 = vdwg.mxu0
    %1969 = vmatpush.msra.mxu0 %v299
    %1970 = vmatpush.msra.mxu0 %v293
    %1971 = vmatpush.msra.mxu0 %v287
    %1972 = vmatpush.msra.mxu0 %v281
    %1973 = vmatpush.msra.mxu0 %v275
    %1974 = vmatpush.msra.mxu0 %v269
    %1975 = vmatpush.msra.mxu0 %v263
    %1976 = vmatpush.msra.mxu0 %v257
    %1977 = vmatpush.msra.mxu0 %v251
    %1978 = vmatpush.msra.mxu0 %v245
    %1979 = vmatpush.msra.mxu0 %v239
    %1980 = vmatpush.msra.mxu0 %v233
    %1981 = vmatpush.msra.mxu0 %v227
    %1982 = vmatpush.msra.mxu0 %v221
    %1983 = vmatpush.msra.mxu0 %v215
    %1984 = vmatpush.msra.mxu0 %v209
    %1985 = vmatmul.f32.gmra.mxu0 %v61
    %v1986 = vpop.f32.mrf.mxu0
    %v1987 = vadd.f32 %v1946, %v1986
    %1988 = vmatmul.f32.gmra.mxu0 %v67
    %v1989 = vpop.f32.mrf.mxu0
    %v1990 = vadd.f32 %v1949, %v1989
    %1991 = vmatmul.f32.gmra.mxu0 %v73
    %v1992 = vpop.f32.mrf.mxu0
    %v1993 = vadd.f32 %v1952, %v1992
    %1994 = vmatmul.f32.gmra.mxu0 %v79
    %v1995 = vpop.f32.mrf.mxu0
    %v1996 = vadd.f32 %v1955, %v1995
    %1997 = vmatmul.f32.gmra.mxu0 %v85
    %v1998 = vpop.f32.mrf.mxu0
    %v1999 = vadd.f32 %v1958, %v1998
    %2000 = vmatmul.f32.gmra.mxu0 %v91
    %v2001 = vpop.f32.mrf.mxu0
    %v2002 = vadd.f32 %v1961, %v2001
    %2003 = vmatmul.f32.gmra.mxu0 %v97
    %v2004 = vpop.f32.mrf.mxu0
    %v2005 = vadd.f32 %v1964, %v2004
    %2006 = vmatmul.f32.gmra.mxu0 %v103
    %v2007 = vpop.f32.mrf.mxu0
    %v2008 = vadd.f32 %v1967, %v2007
    %2009 = vdwg.mxu0
    %2010 = vmatpush.msra.mxu0 %v395
    %2011 = vmatpush.msra.mxu0 %v389
    %2012 = vmatpush.msra.mxu0 %v383
    %2013 = vmatpush.msra.mxu0 %v377
    %2014 = vmatpush.msra.mxu0 %v371
    %2015 = vmatpush.msra.mxu0 %v365
    %2016 = vmatpush.msra.mxu0 %v359
    %2017 = vmatpush.msra.mxu0 %v353
    %2018 = vmatpush.msra.mxu0 %v347
    %2019 = vmatpush.msra.mxu0 %v341
    %2020 = vmatpush.msra.mxu0 %v335
    %2021 = vmatpush.msra.mxu0 %v329
    %2022 = vmatpush.msra.mxu0 %v323
    %2023 = vmatpush.msra.mxu0 %v317
    %2024 = vmatpush.msra.mxu0 %v311
    %2025 = vmatpush.msra.mxu0 %v305
    %2026 = vmatmul.f32.gmra.mxu0 %v62
    %v2027 = vpop.f32.mrf.mxu0
    %v2028 = vadd.f32 %v1987, %v2027
    %2029 = vmatmul.f32.gmra.mxu0 %v68
    %v2030 = vpop.f32.mrf.mxu0
    %v2031 = vadd.f32 %v1990, %v2030
    %2032 = vmatmul.f32.gmra.mxu0 %v74
    %v2033 = vpop.f32.mrf.mxu0
    %v2034 = vadd.f32 %v1993, %v2033
    %2035 = vmatmul.f32.gmra.mxu0 %v80
    %v2036 = vpop.f32.mrf.mxu0
    %v2037 = vadd.f32 %v1996, %v2036
    %2038 = vmatmul.f32.gmra.mxu0 %v86
    %v2039 = vpop.f32.mrf.mxu0
    %v2040 = vadd.f32 %v1999, %v2039
    %2041 = vmatmul.f32.gmra.mxu0 %v92
    %v2042 = vpop.f32.mrf.mxu0
    %v2043 = vadd.f32 %v2002, %v2042
    %2044 = vmatmul.f32.gmra.mxu0 %v98
    %v2045 = vpop.f32.mrf.mxu0
    %v2046 = vadd.f32 %v2005, %v2045
    %2047 = vmatmul.f32.gmra.mxu0 %v104
    %v2048 = vpop.f32.mrf.mxu0
    %v2049 = vadd.f32 %v2008, %v2048
    %2050 = vdwg.mxu0
    %2051 = vmatpush.msra.mxu0 %v491
    %2052 = vmatpush.msra.mxu0 %v485
    %2053 = vmatpush.msra.mxu0 %v479
    %2054 = vmatpush.msra.mxu0 %v473
    %2055 = vmatpush.msra.mxu0 %v467
    %2056 = vmatpush.msra.mxu0 %v461
    %2057 = vmatpush.msra.mxu0 %v455
    %2058 = vmatpush.msra.mxu0 %v449
    %2059 = vmatpush.msra.mxu0 %v443
    %2060 = vmatpush.msra.mxu0 %v437
    %2061 = vmatpush.msra.mxu0 %v431
    %2062 = vmatpush.msra.mxu0 %v425
    %2063 = vmatpush.msra.mxu0 %v419
    %2064 = vmatpush.msra.mxu0 %v413
    %2065 = vmatpush.msra.mxu0 %v407
    %2066 = vmatpush.msra.mxu0 %v401
    %2067 = vmatmul.f32.gmra.mxu0 %v63
    %v2068 = vpop.f32.mrf.mxu0
    %v2069 = vadd.f32 %v2028, %v2068
    %2070 = vmatmul.f32.gmra.mxu0 %v69
    %v2071 = vpop.f32.mrf.mxu0
    %v2072 = vadd.f32 %v2031, %v2071
    %2073 = vmatmul.f32.gmra.mxu0 %v75
    %v2074 = vpop.f32.mrf.mxu0
    %v2075 = vadd.f32 %v2034, %v2074
    %2076 = vmatmul.f32.gmra.mxu0 %v81
    %v2077 = vpop.f32.mrf.mxu0
    %v2078 = vadd.f32 %v2037, %v2077
    %2079 = vmatmul.f32.gmra.mxu0 %v87
    %v2080 = vpop.f32.mrf.mxu0
    %v2081 = vadd.f32 %v2040, %v2080
    %2082 = vmatmul.f32.gmra.mxu0 %v93
    %v2083 = vpop.f32.mrf.mxu0
    %v2084 = vadd.f32 %v2043, %v2083
    %2085 = vmatmul.f32.gmra.mxu0 %v99
    %v2086 = vpop.f32.mrf.mxu0
    %v2087 = vadd.f32 %v2046, %v2086
    %2088 = vmatmul.f32.gmra.mxu0 %v105
    %v2089 = vpop.f32.mrf.mxu0
    %v2090 = vadd.f32 %v2049, %v2089
    %2091 = vdwg.mxu0
    %2092 = vmatpush.msra.mxu0 %v587
    %2093 = vmatpush.msra.mxu0 %v581
    %2094 = vmatpush.msra.mxu0 %v575
    %2095 = vmatpush.msra.mxu0 %v569
    %2096 = vmatpush.msra.mxu0 %v563
    %2097 = vmatpush.msra.mxu0 %v557
    %2098 = vmatpush.msra.mxu0 %v551
    %2099 = vmatpush.msra.mxu0 %v545
    %2100 = vmatpush.msra.mxu0 %v539
    %2101 = vmatpush.msra.mxu0 %v533
    %2102 = vmatpush.msra.mxu0 %v527
    %2103 = vmatpush.msra.mxu0 %v521
    %2104 = vmatpush.msra.mxu0 %v515
    %2105 = vmatpush.msra.mxu0 %v509
    %2106 = vmatpush.msra.mxu0 %v503
    %2107 = vmatpush.msra.mxu0 %v497
    %2108 = vmatmul.f32.gmra.mxu0 %v64
    %v2109 = vpop.f32.mrf.mxu0
    %v2110 = vadd.f32 %v2069, %v2109
    %2111 = vmatmul.f32.gmra.mxu0 %v70
    %v2112 = vpop.f32.mrf.mxu0
    %v2113 = vadd.f32 %v2072, %v2112
    %2114 = vmatmul.f32.gmra.mxu0 %v76
    %v2115 = vpop.f32.mrf.mxu0
    %v2116 = vadd.f32 %v2075, %v2115
    %2117 = vmatmul.f32.gmra.mxu0 %v82
    %v2118 = vpop.f32.mrf.mxu0
    %v2119 = vadd.f32 %v2078, %v2118
    %2120 = vmatmul.f32.gmra.mxu0 %v88
    %v2121 = vpop.f32.mrf.mxu0
    %v2122 = vadd.f32 %v2081, %v2121
    %2123 = vmatmul.f32.gmra.mxu0 %v94
    %v2124 = vpop.f32.mrf.mxu0
    %v2125 = vadd.f32 %v2084, %v2124
    %2126 = vmatmul.f32.gmra.mxu0 %v100
    %v2127 = vpop.f32.mrf.mxu0
    %v2128 = vadd.f32 %v2087, %v2127
    %2129 = vmatmul.f32.gmra.mxu0 %v106
    %v2130 = vpop.f32.mrf.mxu0
    %v2131 = vadd.f32 %v2090, %v2130
    %2132 = vdwg.mxu0
    %2133 = vmatpush.msra.mxu0 %v683
    %2134 = vmatpush.msra.mxu0 %v677
    %2135 = vmatpush.msra.mxu0 %v671
    %2136 = vmatpush.msra.mxu0 %v665
    %2137 = vmatpush.msra.mxu0 %v659
    %2138 = vmatpush.msra.mxu0 %v653
    %2139 = vmatpush.msra.mxu0 %v647
    %2140 = vmatpush.msra.mxu0 %v641
    %2141 = vmatpush.msra.mxu0 %v635
    %2142 = vmatpush.msra.mxu0 %v629
    %2143 = vmatpush.msra.mxu0 %v623
    %2144 = vmatpush.msra.mxu0 %v617
    %2145 = vmatpush.msra.mxu0 %v611
    %2146 = vmatpush.msra.mxu0 %v605
    %2147 = vmatpush.msra.mxu0 %v599
    %2148 = vmatpush.msra.mxu0 %v593
    %2149 = vmatmul.f32.gmra.mxu0 %v65
    %v2150 = vpop.f32.mrf.mxu0
    %v2151 = vadd.f32 %v2110, %v2150
    %2152 = vmatmul.f32.gmra.mxu0 %v71
    %v2153 = vpop.f32.mrf.mxu0
    %v2154 = vadd.f32 %v2113, %v2153
    %2155 = vmatmul.f32.gmra.mxu0 %v77
    %v2156 = vpop.f32.mrf.mxu0
    %v2157 = vadd.f32 %v2116, %v2156
    %2158 = vmatmul.f32.gmra.mxu0 %v83
    %v2159 = vpop.f32.mrf.mxu0
    %v2160 = vadd.f32 %v2119, %v2159
    %2161 = vmatmul.f32.gmra.mxu0 %v89
    %v2162 = vpop.f32.mrf.mxu0
    %v2163 = vadd.f32 %v2122, %v2162
    %2164 = vmatmul.f32.gmra.mxu0 %v95
    %v2165 = vpop.f32.mrf.mxu0
    %v2166 = vadd.f32 %v2125, %v2165
    %2167 = vmatmul.f32.gmra.mxu0 %v101
    %v2168 = vpop.f32.mrf.mxu0
    %v2169 = vadd.f32 %v2128, %v2168
    %2170 = vmatmul.f32.gmra.mxu0 %v107
    %v2171 = vpop.f32.mrf.mxu0
    %v2172 = vadd.f32 %v2131, %v2171
    %2173 = vdwg.mxu0
    %v2174 = vpack.c.bf16 %v1167, %v921
    %v2175 = vpack.c.bf16 %v1659, %v1413
    %v2176 = vpack.c.bf16 %v2151, %v1905
    %v2177 = vpack.c.bf16 %v1170, %v924
    %v2178 = vpack.c.bf16 %v1662, %v1416
    %v2179 = vpack.c.bf16 %v2154, %v1908
    %v2180 = vpack.c.bf16 %v1173, %v927
    %v2181 = vpack.c.bf16 %v1665, %v1419
    %v2182 = vpack.c.bf16 %v2157, %v1911
    %v2183 = vpack.c.bf16 %v1176, %v930
    %v2184 = vpack.c.bf16 %v1668, %v1422
    %v2185 = vpack.c.bf16 %v2160, %v1914
    %v2186 = vpack.c.bf16 %v1179, %v933
    %v2187 = vpack.c.bf16 %v1671, %v1425
    %v2188 = vpack.c.bf16 %v2163, %v1917
    %v2189 = vpack.c.bf16 %v1182, %v936
    %v2190 = vpack.c.bf16 %v1674, %v1428
    %v2191 = vpack.c.bf16 %v2166, %v1920
    %v2192 = vpack.c.bf16 %v1185, %v939
    %v2193 = vpack.c.bf16 %v1677, %v1431
    %v2194 = vpack.c.bf16 %v2169, %v1923
    %v2195 = vpack.c.bf16 %v1188, %v942
    %v2196 = vpack.c.bf16 %v1680, %v1434
    %v2197 = vpack.c.bf16 %v2172, %v1926
    %2198 = vst [vmem:[#allocation8] sm:$0xff] %v2174
    %2199 = vst [vmem:[#allocation8 + $0x8] sm:$0xff] %v2175
    %2200 = vst [vmem:[#allocation8 + $0x10] sm:$0xff] %v2176
    %2201 = vst [vmem:[#allocation8 + $0x18] sm:$0xff] %v2177
    %2202 = vst [vmem:[#allocation8 + $0x20] sm:$0xff] %v2178
    %2203 = vst [vmem:[#allocation8 + $0x28] sm:$0xff] %v2179
    %2204 = vst [vmem:[#allocation8 + $0x30] sm:$0xff] %v2180
    %2205 = vst [vmem:[#allocation8 + $0x38] sm:$0xff] %v2181
    %2206 = vst [vmem:[#allocation8 + $0x40] sm:$0xff] %v2182
    %2207 = vst [vmem:[#allocation8 + $0x48] sm:$0xff] %v2183
    %2208 = vst [vmem:[#allocation8 + $0x50] sm:$0xff] %v2184
    %2209 = vst [vmem:[#allocation8 + $0x58] sm:$0xff] %v2185
    %2210 = vst [vmem:[#allocation8 + $0x60] sm:$0xff] %v2186
    %2211 = vst [vmem:[#allocation8 + $0x68] sm:$0xff] %v2187
    %2212 = vst [vmem:[#allocation8 + $0x70] sm:$0xff] %v2188
    %2213 = vst [vmem:[#allocation8 + $0x78] sm:$0xff] %v2189
    %2214 = vst [vmem:[#allocation8 + $0x80] sm:$0xff] %v2190
    %2215 = vst [vmem:[#allocation8 + $0x88] sm:$0xff] %v2191
    %2216 = vst [vmem:[#allocation8 + $0x90] sm:$0xff] %v2192
    %2217 = vst [vmem:[#allocation8 + $0x98] sm:$0xff] %v2193
    %2218 = vst [vmem:[#allocation8 + $0xa0] sm:$0xff] %v2194
    %2219 = vst [vmem:[#allocation8 + $0xa8] sm:$0xff] %v2195
    %2220 = vst [vmem:[#allocation8 + $0xb0] sm:$0xff] %v2196
    %2221 = vst [vmem:[#allocation8 + $0xb8] sm:$0xff] %v2197
    // Predicated region
    $region26: #{tpu_custom_call.1} parent=1 // pred_check
      _
    $region27: #{tpu_custom_call.1} parent=1 // pred_check_branch
      %2223 = sbr.rel (0) target = $region29
    $region28: #{tpu_custom_call.1} parent=1 // pred_region
      %2225 = vsyncadd [#allocation4], 0
      %s2226 = sshll.u32 [#allocation8], 4
      %s2227 = int_to_ptr.vmem [resolvable:$true] %s2226
      %s2228 = sshll.u32 %s3, 4
      %s2229 = int_to_ptr.hbm [resolvable:$true] %s2228
      %2234 = dma.vmem_to_hbm [thread:$0]  %s2227, 3072, %s2229, [#allocation4], 384, 384, 24
    $region29: #{tpu_custom_call.1} parent=1 // pred_fallthru
      _
    // Predicated region
    $region30: #{tpu_custom_call.1} parent=1 // pred_check
      _
    $region31: #{tpu_custom_call.1} parent=1 // pred_check_branch
      %2236 = sbr.rel (0) target = $region33
    $region32: #{tpu_custom_call.1} parent=1 // pred_region
      %2238 = dma.done [#allocation4], 3072
    $region33: #{tpu_custom_call.1} parent=1 // pred_fallthru
      _
    %2239 = vsyncpa [#allocation3], 1
    %2240 = vsyncpa [#allocation6], 1
    %2241 = vsyncpa [#allocation4], 1

</llo_original>
